<compile_context>
chip_gen: v5e
topology: v5e:2x2
jax: 0.10.0
libtpu: 0.0.40
codegen_flags: <defaults>
</compile_context>

<pallas_src>
import functools

import jax
import jax.numpy as jnp
import numpy as np
from jax.experimental import pallas as pl
from jax.experimental.pallas import tpu as pltpu

MXU_DTYPE = jnp.bfloat16


def _round_up(x, m):
    return (x + m - 1) // m * m


# ----------------------------- Pallas kernel --------------------------------
def _unet_up_kernel(x_ref, w1f_ref, b1f_ref, w2f_ref, b2f_ref, o_ref, *, U, R, M1p):
    """Fused ConvTranspose(2,2) + Conv3x3/ReLU + Conv3x3/ReLU for one image.

    x_ref  : (1, H, WCp)        lane-packed (and lane-padded) input rows, bf16
    w1f_ref: (2*WCp, 2*M1p)     stage-1 fused weights: row offset d on K, parity s on lanes
    b1f_ref: (1, 2*M1p)         stage-1 fused bias (f32)
    w2f_ref: (3*M1p, M2p)       stage-2 block-Toeplitz weights, kh stacked on K
    b2f_ref: (1, M2p)           stage-2 bias (f32)
    o_ref  : (1, R, M2p)        output rows (already row-interleaved), f32
    with U = H-1 (rows per parity after stage 1), R = 2H-4 (output rows).
    """
    x = x_ref[0]                                                  # (H, WCp) bf16

    # ---- Stage 1: one GEMM. LHS row u = [x[u] || x[u+1]]  (K = 2*WCp, lane-aligned).
    lhs1 = jnp.concatenate([x[0:U], x[1:U + 1]], axis=1)          # (U, 2*WCp) bf16
    s1 = jnp.dot(lhs1, w1f_ref[...], preferred_element_type=jnp.float32)
    s1 = jnp.maximum(s1 + b1f_ref[...], 0.0)                      # (U, 2*M1p) f32
    s1 = s1.astype(w1f_ref.dtype)                                 # cast to bf16 ONCE

    # Parity lives on the lane axis (block s of width M1p); move it onto rows so that
    # z1 rows are the interleaved conv1 output rows 0..2U-1. Lane dim stays 256-wide.
    z1 = jnp.stack([s1[:, :M1p], s1[:, M1p:]], axis=1).reshape(2 * U, M1p)

    # ---- Stage 2: one GEMM. LHS row r = [z1[r] || z1[r+1] || z1[r+2]] (kh-major K),
    # so output rows come out in natural (interleaved) order and store contiguously.
    lhs2 = jnp.concatenate([z1[0:R], z1[1:R + 1], z1[2:R + 2]], axis=1)   # (R, 3*M1p)
    s2 = jnp.dot(lhs2, w2f_ref[...], preferred_element_type=jnp.float32)  # (R, M2p)
    o_ref[0] = jnp.maximum(s2 + b2f_ref[...], 0.0).astype(o_ref.dtype)


def _fused_pallas_call(x_lanes, w1f, b1f, w2f, b2f, *, H, M1p, M2p):
    N, _, WCp = x_lanes.shape
    R = 2 * H - 4
    kernel = functools.partial(_unet_up_kernel, U=H - 1, R=R, M1p=M1p)
    return pl.pallas_call(
        kernel,
        out_shape=jax.ShapeDtypeStruct((N, R, M2p), jnp.float32),
        grid=(N,),
        in_specs=[
            pl.BlockSpec((1, H, WCp), lambda n: (n, 0, 0)),
            pl.BlockSpec(w1f.shape, lambda n: (0, 0)),
            pl.BlockSpec(b1f.shape, lambda n: (0, 0)),
            pl.BlockSpec(w2f.shape, lambda n: (0, 0)),
            pl.BlockSpec(b2f.shape, lambda n: (0, 0)),
        ],
        out_specs=pl.BlockSpec((1, R, M2p), lambda n: (n, 0, 0)),
        compiler_params=pltpu.CompilerParams(dimension_semantics=("parallel",)),
    )(x_lanes, w1f, b1f, w2f, b2f)


# ----------------- host-side weight folding (numpy, runs ONCE) ---------------
def _conv_row_toeplitz_np(w, w_out):
    """w: (Co, Ci, KH, KW) -> (KH, (w_out+KW-1)*Ci, w_out*Co) block-Toeplitz matrices.

    M[kh][(q+kw)*Ci + c, q*Co + o] = w[o, c, kh, kw]; a lane-packed input row
    (width*Ci) times M[kh] is that kh's contribution to the lane-packed output row.
    """
    Co, Ci, KH, KW = w.shape
    w_in = w_out + KW - 1
    mats = np.zeros((KH, w_in * Ci, w_out * Co), np.float32)
    for kh in range(KH):
        for kw in range(KW):
            blk = w[:, :, kh, kw].T                       # (Ci, Co)
            for q in range(w_out):
                mats[kh, (q + kw) * Ci:(q + kw + 1) * Ci, q * Co:(q + 1) * Co] += blk
    return mats


def _upsample_row_matrix_np(wt, W):
    """wt: (Ci, Ci, 2, 2) -> (2, W*Ci, 2W*Ci): per output-row parity a,
    T[a][j*Ci + ci, (2j+b)*Ci + c] = wt[ci, c, a, b]."""
    Ci = wt.shape[0]
    mats = np.zeros((2, W * Ci, 2 * W * Ci), np.float32)
    for a in range(2):
        for b in range(2):
            for j in range(W):
                mats[a, j * Ci:(j + 1) * Ci, (2 * j + b) * Ci:(2 * j + b + 1) * Ci] = wt[:, :, a, b]
    return mats


def make_unet_up(wt, bt, w1, b1, w2, b2, *, H, W):
    """Fold all weights once (numpy), return a jitted forward(x_nchw) closure."""
    wt = np.asarray(wt, np.float32); bt = np.asarray(bt, np.float32)
    w1 = np.asarray(w1, np.float32); b1 = np.asarray(b1, np.float32)
    w2 = np.asarray(w2, np.float32); b2 = np.asarray(b2, np.float32)
    Cin, Cm, Co = wt.shape[0], w1.shape[0], w2.shape[0]
    W1, W2 = 2 * W - 2, 2 * W - 4
    WC = W * Cin;   WCp = _round_up(WC, 128)
    M1 = W1 * Cm;   M1p = _round_up(M1, 128)
    M2 = W2 * Co;   M2p = _round_up(M2, 128)

    # Stage-1 fold: ConvTranspose(k=2,s=2) composed with conv1 per output-row parity.
    # conv1 output row 2u+s reads upsampled rows 2u+s+kh = 2(u+d)+a with
    # a=(s+kh)%2, d=(s+kh)//2, so T_up[a] @ T1[kh] lands in the (s, d) slot.
    # NOTE: the bias fold below (bt seen at all 3 kh taps) is ONLY valid for
    # ConvTranspose kernel_size=2, stride=2 followed by a 'valid' 3x3 conv.
    T_up = _upsample_row_matrix_np(wt, W)                 # (2, WC, 2W*Cin)
    T1 = _conv_row_toeplitz_np(w1, W1)                    # (3, 2W*Cin, M1)
    w1f = np.zeros((2, 2, WC, M1), np.float32)
    for s in range(2):
        for kh in range(3):
            a, d = (s + kh) % 2, (s + kh) // 2
            w1f[s, d] += T_up[a] @ T1[kh]
    b1f = np.tile(b1, W1) + np.tile(bt, 2 * W) @ T1.sum(axis=0)   # (M1,)

    # Pack stage-1: row offset d on K (padded to WCp), parity s on output lanes (padded to M1p).
    W1F = np.zeros((2 * WCp, 2 * M1p), np.float32)
    B1F = np.zeros((1, 2 * M1p), np.float32)
    for d in range(2):
        for s in range(2):
            W1F[d * WCp:d * WCp + WC, s * M1p:s * M1p + M1] = w1f[s, d]
    for s in range(2):
        B1F[0, s * M1p:s * M1p + M1] = b1f

    # Pack stage-2: kh stacked on K (kh-major, 128-aligned M1p blocks), lanes padded to M2p.
    T2 = _conv_row_toeplitz_np(w2, W2)                    # (3, M1, M2)
    W2F = np.zeros((3 * M1p, M2p), np.float32)
    B2F = np.zeros((1, M2p), np.float32)
    for kh in range(3):
        W2F[kh * M1p:kh * M1p + M1, :M2] = T2[kh]
    B2F[0, :M2] = np.tile(b2, W2)

    w1f_d = jnp.asarray(W1F, MXU_DTYPE)
    b1f_d = jnp.asarray(B1F, jnp.float32)
    w2f_d = jnp.asarray(W2F, MXU_DTYPE)
    b2f_d = jnp.asarray(B2F, jnp.float32)

    @jax.jit
    def forward(x_nchw):
        N, Cin_, H_, W_ = x_nchw.shape
        assert (Cin_, H_, W_) == (Cin, H, W), "weights were folded for a different shape"
        # lane-packed rows x_lanes[n, i, j*Cin+ci] = x[n, ci, i, j]; zero-pad lanes to
        # WCp and cast to bf16 at the kernel boundary (halves input DMA bytes).
        x_lanes = jnp.transpose(x_nchw, (0, 2, 3, 1)).reshape(N, H, WC)
        x_lanes = jnp.pad(x_lanes, ((0, 0), (0, 0), (0, WCp - WC))).astype(MXU_DTYPE)
        out = _fused_pallas_call(x_lanes, w1f_d, b1f_d, w2f_d, b2f_d,
                                 H=H, M1p=M1p, M2p=M2p)
        # Rows are already interleaved by the kernel; only drop the lane padding and
        # convert to NCHW (kept because the module's consumer contract is NCHW).
        out = out[..., :M2].reshape(N, 2 * H - 4, W2, Co)
        return jnp.transpose(out, (0, 3, 1, 2))

    return forward


# --------------------------- pure-jnp reference ------------------------------
def ref_forward(x, wt, bt, w1, b1, w2, b2):
    N, Cin, H, W = x.shape
    y = jnp.einsum('nihw,iokl->nohkwl', x, wt).reshape(N, Cin, 2 * H, 2 * W)
    y = y + bt[None, :, None, None]

    def conv3(z, w, b):
        Ho, Wo = z.shape[2] - 2, z.shape[3] - 2
        out = jnp.zeros((z.shape[0], w.shape[0], Ho, Wo), z.dtype) + b[None, :, None, None]
        for kh in range(3):
            for kw in range(3):
                out = out + jnp.einsum('nchw,oc->nohw',
                                       z[:, :, kh:kh + Ho, kw:kw + Wo], w[:, :, kh, kw])
        return out

    z = jnp.maximum(conv3(y, w1, b1), 0.0)
    z = jnp.maximum(conv3(z, w2, b2), 0.0)
    return z


# --------------------------------- main --------------------------------------
if __name__ == "__main__":
    N, Cin, Cout, H, W = 2, 4, 8, 16, 16
    keys = jax.random.split(jax.random.PRNGKey(0), 7)
    x = jax.random.normal(keys[0], (N, Cin, H, W), jnp.float32)
    # ConvTranspose2d(Cin, Cin, 2, 2): weight (Cin, Cin, 2, 2), bias (Cin,)
    wt = jax.random.normal(keys[1], (Cin, Cin, 2, 2), jnp.float32) * 0.1
    bt = jax.random.normal(keys[2], (Cin,), jnp.float32) * 0.1
    # Conv2d(Cin, Cout, 3): weight (Cout, Cin, 3, 3), bias (Cout,)
    w1 = jax.random.normal(keys[3], (Cout, Cin, 3, 3), jnp.float32) * 0.1
    b1 = jax.random.normal(keys[4], (Cout,), jnp.float32) * 0.1
    # Conv2d(Cout, Cout, 3): weight (Cout, Cout, 3, 3), bias (Cout,)
    w2 = jax.random.normal(keys[5], (Cout, Cout, 3, 3), jnp.float32) * 0.1
    b2 = jax.random.normal(keys[6], (Cout,), jnp.float32) * 0.1

    forward = make_unet_up(wt, bt, w1, b1, w2, b2, H=H, W=W)   # one-time weight fold
    out = jax.block_until_ready(forward(x))

    ref = ref_forward(x, wt, bt, w1, b1, w2, b2)
    assert out.shape == (N, Cout, 2 * H - 4, 2 * W - 4), out.shape
    # Tolerance reflects bf16 MXU operands (f32 accumulation) vs. f32 reference.
    np.testing.assert_allclose(np.asarray(out), np.asarray(ref), rtol=3e-2, atol=2e-2)
    print("KERNEL_OK")
</pallas_src>

<mosaic_0001>
module attributes {stable_mosaic.version = 11 : i64} {
  func.func @_unet_up_kernel(%arg0: i32, %arg1: memref<1x16x128xbf16, #tpu.memory_space<vmem>>, %arg2: memref<256x512xbf16, #tpu.memory_space<vmem>>, %arg3: memref<1x512xf32, #tpu.memory_space<vmem>>, %arg4: memref<768x256xbf16, #tpu.memory_space<vmem>>, %arg5: memref<1x256xf32, #tpu.memory_space<vmem>>, %arg6: memref<1x28x256xf32, #tpu.memory_space<vmem>>) attributes {dimension_semantics = [#tpu.dimension_semantics<parallel>], iteration_bounds = array<i64: 2>, scalar_prefetch = 0 : i64, scratch_operands = 0 : i64, tpu.core_type = #tpu.core_type<tc>, window_params = [{transform_indices = @transform_0, window_bounds = array<i64: 1, 16, 128>}, {pipeline_mode = #tpu.pipeline_mode<synchronous>, transform_indices = @transform_1, window_bounds = array<i64: 256, 512>}, {pipeline_mode = #tpu.pipeline_mode<synchronous>, transform_indices = @transform_2, window_bounds = array<i64: 1, 512>}, {pipeline_mode = #tpu.pipeline_mode<synchronous>, transform_indices = @transform_3, window_bounds = array<i64: 768, 256>}, {pipeline_mode = #tpu.pipeline_mode<synchronous>, transform_indices = @transform_4, window_bounds = array<i64: 1, 256>}, {transform_indices = @transform_5, window_bounds = array<i64: 1, 28, 256>}]} {
    %c0 = arith.constant 0 : index
    %c0_0 = arith.constant 0 : index
    %c0_1 = arith.constant 0 : index
    %0 = vector.load %arg1[%c0, %c0_0, %c0_1] : memref<1x16x128xbf16, #tpu.memory_space<vmem>>, vector<1x16x128xbf16>
    %1 = vector.shape_cast %0 : vector<1x16x128xbf16> to vector<16x128xbf16>
    %2 = vector.extract_strided_slice %1 {offsets = [0, 0], sizes = [15, 128], strides = [1, 1]} : vector<16x128xbf16> to vector<15x128xbf16>
    %3 = vector.extract_strided_slice %1 {offsets = [1, 0], sizes = [15, 128], strides = [1, 1]} : vector<16x128xbf16> to vector<15x128xbf16>
    %4 = tpu.concatenate %2, %3 in 1 : vector<15x128xbf16>, vector<15x128xbf16> -> vector<15x256xbf16>
    %c0_2 = arith.constant 0 : index
    %c0_3 = arith.constant 0 : index
    %5 = vector.load %arg2[%c0_2, %c0_3] : memref<256x512xbf16, #tpu.memory_space<vmem>>, vector<256x512xbf16>
    %cst = arith.constant dense<0.000000e+00> : vector<15x512xf32>
    %6 = tpu.matmul %4, %5, %cst {dimension_numbers = #tpu.dot_dimension_numbers<[1], [0], [0], [1], [0, 0, 1, 1], [], []>} : vector<15x256xbf16>, vector<256x512xbf16>, vector<15x512xf32> -> vector<15x512xf32>
    %c0_4 = arith.constant 0 : index
    %c0_5 = arith.constant 0 : index
    %7 = vector.load %arg3[%c0_4, %c0_5] : memref<1x512xf32, #tpu.memory_space<vmem>>, vector<1x512xf32>
    %8 = vector.broadcast %7 : vector<1x512xf32> to vector<15x512xf32>
    %9 = arith.addf %6, %8 : vector<15x512xf32>
    %cst_6 = arith.constant 0.000000e+00 : f32
    %10 = vector.broadcast %cst_6 : f32 to vector<15x512xf32>
    %11 = arith.maximumf %9, %10 : vector<15x512xf32>
    %12 = arith.truncf %11 : vector<15x512xf32> to vector<15x512xbf16>
    %13 = vector.extract_strided_slice %12 {offsets = [0, 0], sizes = [15, 256], strides = [1, 1]} : vector<15x512xbf16> to vector<15x256xbf16>
    %14 = vector.extract_strided_slice %12 {offsets = [0, 256], sizes = [15, 256], strides = [1, 1]} : vector<15x512xbf16> to vector<15x256xbf16>
    %15 = vector.shape_cast %13 : vector<15x256xbf16> to vector<15x1x256xbf16>
    %16 = vector.shape_cast %14 : vector<15x256xbf16> to vector<15x1x256xbf16>
    %17 = tpu.concatenate %15, %16 in 1 : vector<15x1x256xbf16>, vector<15x1x256xbf16> -> vector<15x2x256xbf16>
    %18 = vector.shape_cast %17 : vector<15x2x256xbf16> to vector<30x256xbf16>
    %19 = vector.extract_strided_slice %18 {offsets = [0, 0], sizes = [28, 256], strides = [1, 1]} : vector<30x256xbf16> to vector<28x256xbf16>
    %20 = vector.extract_strided_slice %18 {offsets = [1, 0], sizes = [28, 256], strides = [1, 1]} : vector<30x256xbf16> to vector<28x256xbf16>
    %21 = vector.extract_strided_slice %18 {offsets = [2, 0], sizes = [28, 256], strides = [1, 1]} : vector<30x256xbf16> to vector<28x256xbf16>
    %22 = tpu.concatenate %19, %20, %21 in 1 : vector<28x256xbf16>, vector<28x256xbf16>, vector<28x256xbf16> -> vector<28x768xbf16>
    %c0_7 = arith.constant 0 : index
    %c0_8 = arith.constant 0 : index
    %23 = vector.load %arg4[%c0_7, %c0_8] : memref<768x256xbf16, #tpu.memory_space<vmem>>, vector<768x256xbf16>
    %cst_9 = arith.constant dense<0.000000e+00> : vector<28x256xf32>
    %24 = tpu.matmul %22, %23, %cst_9 {dimension_numbers = #tpu.dot_dimension_numbers<[1], [0], [0], [1], [0, 0, 1, 1], [], []>} : vector<28x768xbf16>, vector<768x256xbf16>, vector<28x256xf32> -> vector<28x256xf32>
    %c0_10 = arith.constant 0 : index
    %c0_11 = arith.constant 0 : index
    %25 = vector.load %arg5[%c0_10, %c0_11] : memref<1x256xf32, #tpu.memory_space<vmem>>, vector<1x256xf32>
    %26 = vector.broadcast %25 : vector<1x256xf32> to vector<28x256xf32>
    %27 = arith.addf %24, %26 : vector<28x256xf32>
    %cst_12 = arith.constant 0.000000e+00 : f32
    %28 = vector.broadcast %cst_12 : f32 to vector<28x256xf32>
    %29 = arith.maximumf %27, %28 : vector<28x256xf32>
    %c0_13 = arith.constant 0 : index
    %c0_14 = arith.constant 0 : index
    %c0_15 = arith.constant 0 : index
    %30 = vector.load %arg6[%c0_13, %c0_14, %c0_15] : memref<1x28x256xf32, #tpu.memory_space<vmem>>, vector<1x28x256xf32>
    %31 = vector.shape_cast %30 : vector<1x28x256xf32> to vector<28x256xf32>
    %32 = vector.shape_cast %29 : vector<28x256xf32> to vector<1x28x256xf32>
    tpu.vector_store %arg6[%c0_13, %c0_14, %c0_15], %32 {strides = array<i32>} : memref<1x28x256xf32, #tpu.memory_space<vmem>>, vector<1x28x256xf32>,
    return
  }
  func.func @transform_0(%arg0: i32) -> (i32, i32, i32) {
    %c0_i32 = arith.constant 0 : i32
    %c0_i32_0 = arith.constant 0 : i32
    %c0_i32_1 = arith.constant 0 : i32
    return %arg0, %c0_i32, %c0_i32_0 : i32, i32, i32
  }
  func.func @transform_1(%arg0: i32) -> (i32, i32) {
    %c0_i32 = arith.constant 0 : i32
    %c0_i32_0 = arith.constant 0 : i32
    %c0_i32_1 = arith.constant 0 : i32
    return %c0_i32, %c0_i32_0 : i32, i32
  }
  func.func @transform_2(%arg0: i32) -> (i32, i32) {
    %c0_i32 = arith.constant 0 : i32
    %c0_i32_0 = arith.constant 0 : i32
    %c0_i32_1 = arith.constant 0 : i32
    return %c0_i32, %c0_i32_0 : i32, i32
  }
  func.func @transform_3(%arg0: i32) -> (i32, i32) {
    %c0_i32 = arith.constant 0 : i32
    %c0_i32_0 = arith.constant 0 : i32
    %c0_i32_1 = arith.constant 0 : i32
    return %c0_i32, %c0_i32_0 : i32, i32
  }
  func.func @transform_4(%arg0: i32) -> (i32, i32) {
    %c0_i32 = arith.constant 0 : i32
    %c0_i32_0 = arith.constant 0 : i32
    %c0_i32_1 = arith.constant 0 : i32
    return %c0_i32, %c0_i32_0 : i32, i32
  }
  func.func @transform_5(%arg0: i32) -> (i32, i32, i32) {
    %c0_i32 = arith.constant 0 : i32
    %c0_i32_0 = arith.constant 0 : i32
    %c0_i32_1 = arith.constant 0 : i32
    return %arg0, %c0_i32, %c0_i32_0 : i32, i32, i32
  }
}

</mosaic_0001>

<llo_original>
// kernel: forward.1
$region0: #{forward.1}
  #allocation0 [shape = 'u32[]', space=smem, size = 0x4, offset = 0x4, fixed_abs, tag = 'smem constant byte address 0x4 - core index']
  #allocation1 [shape = 'u32[72,128]{1,0:T(1,128)}', space=vmem, size = 0x9000, scoped, tag = 'internal scratch']
  %s0 = inlined_call_operand.vmem [shape: bf16[2,16,128], index: 0, kind: input, shape index: {}]
  %s1 = inlined_call_operand.hbm [shape: bf16[256,512], index: 1, kind: input, shape index: {}]
  %s2 = inlined_call_operand.vmem [shape: f32[1,512], index: 2, kind: input, shape index: {}]
  %s3 = inlined_call_operand.hbm [shape: bf16[768,256], index: 3, kind: input, shape index: {}]
  %s4 = inlined_call_operand.vmem [shape: f32[1,256], index: 4, kind: input, shape index: {}]
  %s5 = inlined_call_operand.vmem [shape: f32[2,28,256], index: 5, kind: output, shape index: {}]
  %s6 = sld [smem:[#allocation0]]
  $region61: #{forward.1} parent=0
    _
  %s8 = ssub.s32 1, %s6
  %s9 = scalar_select 0, %s8, %s6
  $region1: #{forward.1} parent=0
    #allocation2 [shape = 'u8[262144]{0}', space=vmem, size = 0x40000, scoped, tag = 'input window, operand 1, single buffered']
    #allocation3 [shape = 's32[2]{0}', space=sflag, size = 0x8, scoped, tag = 'scoped memory for forward.1']
    #allocation4 [shape = 'u8[393216]{0}', space=vmem, size = 0x60000, scoped, tag = 'input window, operand 3, single buffered']
    #allocation5 [shape = 's32[1]{0}', space=sflag, size = 0x4, scoped, tag = 'scoped memory for forward.1']
    %10 = vsyncpa [#allocation3], 0
    %11 = vsyncpa [#allocation5], 0
    loop: start=0, step=1, limit=4
    $region2: #{forward.1} parent=1 // loop_pre_header
      _
    $region3: #{forward.1} parent=1 // loop_header
      %s13 = sphi 0, %s17
      %p14 = scmp.ge.s32.totalorder %s13, 4
      %s23 = sphi 0, %s25
      %s26 = sphi 0, %s23
      %s27 = sphi 0, %s26
      %s43 = sphi 0, %s27
      %s47 = sphi 0, %s47
      %s49 = sphi 0, %s47
      %s50 = sphi 0, %s49
      %s64 = sphi 0, %s50
      %s68 = sphi 0, %s68
      %s70 = sphi 0, %s68
      %s71 = sphi 0, %s70
      %s85 = sphi 0, %s71
      %s89 = sphi 0, %s89
      %s91 = sphi 0, %s89
      %s92 = sphi 0, %s91
      %s106 = sphi 0, %s92
      %s110 = sphi 0, %s110
      %s112 = sphi 0, %s110
      %s113 = sphi 0, %s112
      %s127 = sphi 0, %s113
      %s133 = sphi 0, %s135
      %s136 = sphi 0, %s133
      %s137 = sphi 0, %s136
      %s153 = sphi 0, %s137
    $region4: #{forward.1} parent=1 // loop_header_branch
      %16 = sbr.rel (%p14) target = $region8
    $region5: #{forward.1} parent=1 // loop_body
      %s18 = ssub.s32 %s13, 1
      %s19 = ssub.s32 %s13, 2
      %s20 = sadd.s32 %s13, 1
      %s21 = ssub.s32 %s13, %s20
      %p22 = scmp.eq.s32.totalorder %s21, 0
      %s24 = sadd.s32 %s23, 1
      %s25 = scalar_select %p22, %s23, %s24
      %p28 = pneg %p22
      %p29 = scmp.eq.s32.totalorder %s13, 1
      %p30 = por %p28, %p29
      %p31 = scmp.ne.s32.totalorder %s23, %s26
      %p32 = scmp.eq.s32.totalorder %s13, 0
      %p33 = por %p31, %p32
      %p34 = scmp.ne.s32.totalorder %s23, %s26
      %p35 = scmp.eq.s32.totalorder %s18, 1
      %p36 = por %p34, %p35
      %p37 = scmp.ne.s32.totalorder %s26, %s27
      %p38 = scmp.eq.s32.totalorder %s18, 0
      %p39 = por %p37, %p38
      %p40 = scmp.ne.s32.totalorder %s26, %s27
      %p41 = scmp.eq.s32.totalorder %s19, 1
      %p42 = por %p40, %p41
      %p44 = scmp.ne.s32.totalorder %s27, %s43
      %p45 = scmp.eq.s32.totalorder %s19, 0
      %p46 = por %p44, %p45
      %s48 = sadd.s32 %s47, 1
      %p51 = scmp.eq.s32.totalorder %s13, 1
      %p52 = scmp.ne.s32.totalorder %s47, %s49
      %p53 = scmp.eq.s32.totalorder %s13, 0
      %p54 = por %p52, %p53
      %p55 = scmp.ne.s32.totalorder %s47, %s49
      %p56 = scmp.eq.s32.totalorder %s18, 1
      %p57 = por %p55, %p56
      %p58 = scmp.ne.s32.totalorder %s49, %s50
      %p59 = scmp.eq.s32.totalorder %s18, 0
      %p60 = por %p58, %p59
      %p61 = scmp.ne.s32.totalorder %s49, %s50
      %p62 = scmp.eq.s32.totalorder %s19, 1
      %p63 = por %p61, %p62
      %p65 = scmp.ne.s32.totalorder %s50, %s64
      %p66 = scmp.eq.s32.totalorder %s19, 0
      %p67 = por %p65, %p66
      %s69 = sadd.s32 %s68, 1
      %p72 = scmp.eq.s32.totalorder %s13, 1
      %p73 = scmp.ne.s32.totalorder %s68, %s70
      %p74 = scmp.eq.s32.totalorder %s13, 0
      %p75 = por %p73, %p74
      %p76 = scmp.ne.s32.totalorder %s68, %s70
      %p77 = scmp.eq.s32.totalorder %s18, 1
      %p78 = por %p76, %p77
      %p79 = scmp.ne.s32.totalorder %s70, %s71
      %p80 = scmp.eq.s32.totalorder %s18, 0
      %p81 = por %p79, %p80
      %p82 = scmp.ne.s32.totalorder %s70, %s71
      %p83 = scmp.eq.s32.totalorder %s19, 1
      %p84 = por %p82, %p83
      %p86 = scmp.ne.s32.totalorder %s71, %s85
      %p87 = scmp.eq.s32.totalorder %s19, 0
      %p88 = por %p86, %p87
      %s90 = sadd.s32 %s89, 1
      %p93 = scmp.eq.s32.totalorder %s13, 1
      %p94 = scmp.ne.s32.totalorder %s89, %s91
      %p95 = scmp.eq.s32.totalorder %s13, 0
      %p96 = por %p94, %p95
      %p97 = scmp.ne.s32.totalorder %s89, %s91
      %p98 = scmp.eq.s32.totalorder %s18, 1
      %p99 = por %p97, %p98
      %p100 = scmp.ne.s32.totalorder %s91, %s92
      %p101 = scmp.eq.s32.totalorder %s18, 0
      %p102 = por %p100, %p101
      %p103 = scmp.ne.s32.totalorder %s91, %s92
      %p104 = scmp.eq.s32.totalorder %s19, 1
      %p105 = por %p103, %p104
      %p107 = scmp.ne.s32.totalorder %s92, %s106
      %p108 = scmp.eq.s32.totalorder %s19, 0
      %p109 = por %p107, %p108
      %s111 = sadd.s32 %s110, 1
      %p114 = scmp.eq.s32.totalorder %s13, 1
      %p115 = scmp.ne.s32.totalorder %s110, %s112
      %p116 = scmp.eq.s32.totalorder %s13, 0
      %p117 = por %p115, %p116
      %p118 = scmp.ne.s32.totalorder %s110, %s112
      %p119 = scmp.eq.s32.totalorder %s18, 1
      %p120 = por %p118, %p119
      %p121 = scmp.ne.s32.totalorder %s112, %s113
      %p122 = scmp.eq.s32.totalorder %s18, 0
      %p123 = por %p121, %p122
      %p124 = scmp.ne.s32.totalorder %s112, %s113
      %p125 = scmp.eq.s32.totalorder %s19, 1
      %p126 = por %p124, %p125
      %p128 = scmp.ne.s32.totalorder %s113, %s127
      %p129 = scmp.eq.s32.totalorder %s19, 0
      %p130 = por %p128, %p129
      %s131 = ssub.s32 %s13, %s20
      %p132 = scmp.eq.s32.totalorder %s131, 0
      %s134 = sadd.s32 %s133, 1
      %s135 = scalar_select %p132, %s133, %s134
      %p138 = pneg %p132
      %p139 = scmp.eq.s32.totalorder %s13, 1
      %p140 = por %p138, %p139
      %p141 = scmp.ne.s32.totalorder %s133, %s136
      %p142 = scmp.eq.s32.totalorder %s13, 0
      %p143 = por %p141, %p142
      %p144 = scmp.ne.s32.totalorder %s133, %s136
      %p145 = scmp.eq.s32.totalorder %s18, 1
      %p146 = por %p144, %p145
      %p147 = scmp.ne.s32.totalorder %s136, %s137
      %p148 = scmp.eq.s32.totalorder %s18, 0
      %p149 = por %p147, %p148
      %p150 = scmp.ne.s32.totalorder %s136, %s137
      %p151 = scmp.eq.s32.totalorder %s19, 1
      %p152 = por %p150, %p151
      %p154 = scmp.ne.s32.totalorder %s137, %s153
      %p155 = scmp.eq.s32.totalorder %s19, 0
      %p156 = por %p154, %p155
      %p157 = scmp.le.s32.totalorder 1, %s13
      %p158 = scmp.lt.s32.totalorder %s13, 3
      %p159 = pnand %p157, %p158
      %p160 = pneg %p159
      // Predicated region
      $region9: #{forward.1} parent=5 // pred_check
        _
      $region10: #{forward.1} parent=5 // pred_check_branch
        %162 = sbr.rel (%p159) target = $region12
      $region11: #{forward.1} parent=5 // pred_region
        %s163 = ssub.s32 %s13, 1
        // Predicated region
        $region13: #{forward.1} parent=11 // pred_check
          %p164 = pneg %p60
        $region14: #{forward.1} parent=11 // pred_check_branch
          %166 = sbr.rel (%p164) target = $region16
        $region15: #{forward.1} parent=11 // pred_region
          %168 = vsyncadd [#allocation3], 0
          %s169 = sshll.u32 %s1, 4
          %s170 = int_to_ptr.hbm [resolvable:$true] %s169
          %s171 = sshll.u32 [#allocation2], 4
          %s172 = int_to_ptr.vmem [resolvable:$true] %s171
          %177 = dma.hbm_to_vmem [thread:$0]  %s170, 8192, %s172, [#allocation3], 256, 256, 16
        $region16: #{forward.1} parent=11 // pred_fallthru
          _
        // Predicated region
        $region17: #{forward.1} parent=11 // pred_check
          %p178 = pneg %p81
        $region18: #{forward.1} parent=11 // pred_check_branch
          %180 = sbr.rel (%p178) target = $region20
        $region19: #{forward.1} parent=11 // pred_region
          _
        $region20: #{forward.1} parent=11 // pred_fallthru
          _
        // Predicated region
        $region21: #{forward.1} parent=11 // pred_check
          %p181 = pneg %p102
        $region22: #{forward.1} parent=11 // pred_check_branch
          %183 = sbr.rel (%p181) target = $region24
        $region23: #{forward.1} parent=11 // pred_region
          %185 = vsyncadd [#allocation5], 0
          %s186 = sshll.u32 %s3, 4
          %s187 = int_to_ptr.hbm [resolvable:$true] %s186
          %s188 = sshll.u32 [#allocation4], 4
          %s189 = int_to_ptr.vmem [resolvable:$true] %s188
          %194 = dma.hbm_to_vmem [thread:$0]  %s187, 12288, %s189, [#allocation5], 128, 128, 8
        $region24: #{forward.1} parent=11 // pred_fallthru
          _
        // Predicated region
        $region25: #{forward.1} parent=11 // pred_check
          %p195 = pneg %p123
        $region26: #{forward.1} parent=11 // pred_check_branch
          %197 = sbr.rel (%p195) target = $region28
        $region27: #{forward.1} parent=11 // pred_region
          _
        $region28: #{forward.1} parent=11 // pred_fallthru
          _
      $region12: #{forward.1} parent=5 // pred_fallthru
        _
      %p198 = scmp.lt.s32.totalorder %s13, 2
      // Predicated region
      $region29: #{forward.1} parent=5 // pred_check
        %p199 = pneg %p198
      $region30: #{forward.1} parent=5 // pred_check_branch
        %201 = sbr.rel (%p199) target = $region32
      $region31: #{forward.1} parent=5 // pred_region
        // Predicated region
        $region33: #{forward.1} parent=31 // pred_check
          %p202 = pneg %p33
        $region34: #{forward.1} parent=31 // pred_check_branch
          %204 = sbr.rel (%p202) target = $region36
        $region35: #{forward.1} parent=31 // pred_region
          %p205 = scmp.lt.s32.totalorder %s13, 1
          %s206 = scalar_select %p205, %s13, 1
          %s207 = smul.addr %s206, 2
          %s208 = smul.addr %s207, 4
          %s209 = scalar_lea.vmem %s0, %s208
        $region36: #{forward.1} parent=31 // pred_fallthru
          _
      $region32: #{forward.1} parent=5 // pred_fallthru
        _
      %p210 = scmp.le.s32.totalorder 1, %s13
      %p211 = scmp.lt.s32.totalorder %s13, 3
      %p212 = pnand %p210, %p211
      %p213 = pneg %p212
      // Predicated region
      $region37: #{forward.1} parent=5 // pred_check
        _
      $region38: #{forward.1} parent=5 // pred_check_branch
        %215 = sbr.rel (%p212) target = $region40
      $region39: #{forward.1} parent=5 // pred_region
        %s216 = ssub.s32 %s13, 1
        // Predicated region
        $region41: #{forward.1} parent=39 // pred_check
          %p217 = pneg %p60
        $region42: #{forward.1} parent=39 // pred_check_branch
          %219 = sbr.rel (%p217) target = $region44
        $region43: #{forward.1} parent=39 // pred_region
          %221 = dma.done [#allocation3], 8192
        $region44: #{forward.1} parent=39 // pred_fallthru
          _
        // Predicated region
        $region45: #{forward.1} parent=39 // pred_check
          %p222 = pneg %p102
        $region46: #{forward.1} parent=39 // pred_check_branch
          %224 = sbr.rel (%p222) target = $region48
        $region47: #{forward.1} parent=39 // pred_region
          %226 = dma.done [#allocation5], 12288
        $region48: #{forward.1} parent=39 // pred_fallthru
          _
        %p227 = scmp.lt.s32.totalorder %s18, 1
        %s228 = scalar_select %p227, %s18, 1
        %s229 = smul.addr %s228, 2
        %s230 = smul.addr %s229, 4
        %s231 = scalar_lea.vmem %s0, %s230
        %p232 = pneg %p39
        %p233 = pneg %p36
        %p234 = pneg %p60
        %p235 = pneg %p57
        %p236 = pneg %p81
        %p237 = pneg %p78
        %p238 = pneg %p102
        %p239 = pneg %p99
        %p240 = pneg %p123
        %p241 = pneg %p120
        %p242 = pneg %p149
        %p243 = pneg %p146
        %p244 = scmp.lt.s32.totalorder %s18, 1
        %s245 = scalar_select %p244, %s18, 1
        %s246 = smul.addr %s245, 8
        %s247 = smul.addr %s246, 8
        %s248 = scalar_lea.vmem %s5, %s247
        %p249 = scmp.lt.s32.totalorder %s18, 1
        %s250 = scalar_select %p249, %s18, 1
        %s251 = smul.addr %s250, 2
        %s252 = smul.addr %s251, 4
        %s253 = scalar_lea.vmem %s0, %s252
        %p254 = scmp.lt.s32.totalorder %s18, 1
        %s255 = scalar_select %p254, %s18, 1
        %s256 = smul.addr %s255, 8
        %s257 = smul.addr %s256, 8
        %s258 = scalar_lea.vmem %s5, %s257
        %v259 = vld [vmem:[%s253] sm:$0xf]
        %v260 = vld [vmem:[%s253 + $0x4] sm:$0xf]
        %v263 = vunpack.c.l.b16 %v259
        %v264 = vunpack.c.l.b16 %v260
        %v265 = vpack.c.b16 %v264, %v263
        %v268 = vshrl.u32 %v265, 16
        %v270 = vshll.u32 %v265, 16
        %v272 = vrot.slane %v270, 1
        %v273 = vor.u32 %v268, %v272
        %v275 = vld [vmem:[#allocation2] sm:$0xff]
        %v276 = vld [vmem:[#allocation2 + $0x8] sm:$0xff]
        %v277 = vld [vmem:[#allocation2 + $0x10] sm:$0xff]
        %v278 = vld [vmem:[#allocation2 + $0x18] sm:$0xff]
        %v279 = vld [vmem:[#allocation2 + $0x20] sm:$0xff]
        %v280 = vld [vmem:[#allocation2 + $0x28] sm:$0xff]
        %v281 = vld [vmem:[#allocation2 + $0x30] sm:$0xff]
        %v282 = vld [vmem:[#allocation2 + $0x38] sm:$0xff]
        %v283 = vld [vmem:[#allocation2 + $0x40] sm:$0xff]
        %v284 = vld [vmem:[#allocation2 + $0x48] sm:$0xff]
        %v285 = vld [vmem:[#allocation2 + $0x50] sm:$0xff]
        %v286 = vld [vmem:[#allocation2 + $0x58] sm:$0xff]
        %v287 = vld [vmem:[#allocation2 + $0x60] sm:$0xff]
        %v288 = vld [vmem:[#allocation2 + $0x68] sm:$0xff]
        %v289 = vld [vmem:[#allocation2 + $0x70] sm:$0xff]
        %v290 = vld [vmem:[#allocation2 + $0x78] sm:$0xff]
        %v291 = vld [vmem:[#allocation2 + $0x80] sm:$0xff]
        %v292 = vld [vmem:[#allocation2 + $0x88] sm:$0xff]
        %v293 = vld [vmem:[#allocation2 + $0x90] sm:$0xff]
        %v294 = vld [vmem:[#allocation2 + $0x98] sm:$0xff]
        %v295 = vld [vmem:[#allocation2 + $0xa0] sm:$0xff]
        %v296 = vld [vmem:[#allocation2 + $0xa8] sm:$0xff]
        %v297 = vld [vmem:[#allocation2 + $0xb0] sm:$0xff]
        %v298 = vld [vmem:[#allocation2 + $0xb8] sm:$0xff]
        %v299 = vld [vmem:[#allocation2 + $0xc0] sm:$0xff]
        %v300 = vld [vmem:[#allocation2 + $0xc8] sm:$0xff]
        %v301 = vld [vmem:[#allocation2 + $0xd0] sm:$0xff]
        %v302 = vld [vmem:[#allocation2 + $0xd8] sm:$0xff]
        %v303 = vld [vmem:[#allocation2 + $0xe0] sm:$0xff]
        %v304 = vld [vmem:[#allocation2 + $0xe8] sm:$0xff]
        %v305 = vld [vmem:[#allocation2 + $0xf0] sm:$0xff]
        %v306 = vld [vmem:[#allocation2 + $0xf8] sm:$0xff]
        %v307 = vld [vmem:[#allocation2 + $0x100] sm:$0xff]
        %v308 = vld [vmem:[#allocation2 + $0x108] sm:$0xff]
        %v309 = vld [vmem:[#allocation2 + $0x110] sm:$0xff]
        %v310 = vld [vmem:[#allocation2 + $0x118] sm:$0xff]
        %v311 = vld [vmem:[#allocation2 + $0x120] sm:$0xff]
        %v312 = vld [vmem:[#allocation2 + $0x128] sm:$0xff]
        %v313 = vld [vmem:[#allocation2 + $0x130] sm:$0xff]
        %v314 = vld [vmem:[#allocation2 + $0x138] sm:$0xff]
        %v315 = vld [vmem:[#allocation2 + $0x140] sm:$0xff]
        %v316 = vld [vmem:[#allocation2 + $0x148] sm:$0xff]
        %v317 = vld [vmem:[#allocation2 + $0x150] sm:$0xff]
        %v318 = vld [vmem:[#allocation2 + $0x158] sm:$0xff]
        %v319 = vld [vmem:[#allocation2 + $0x160] sm:$0xff]
        %v320 = vld [vmem:[#allocation2 + $0x168] sm:$0xff]
        %v321 = vld [vmem:[#allocation2 + $0x170] sm:$0xff]
        %v322 = vld [vmem:[#allocation2 + $0x178] sm:$0xff]
        %v323 = vld [vmem:[#allocation2 + $0x180] sm:$0xff]
        %v324 = vld [vmem:[#allocation2 + $0x188] sm:$0xff]
        %v325 = vld [vmem:[#allocation2 + $0x190] sm:$0xff]
        %v326 = vld [vmem:[#allocation2 + $0x198] sm:$0xff]
        %v327 = vld [vmem:[#allocation2 + $0x1a0] sm:$0xff]
        %v328 = vld [vmem:[#allocation2 + $0x1a8] sm:$0xff]
        %v329 = vld [vmem:[#allocation2 + $0x1b0] sm:$0xff]
        %v330 = vld [vmem:[#allocation2 + $0x1b8] sm:$0xff]
        %v331 = vld [vmem:[#allocation2 + $0x1c0] sm:$0xff]
        %v332 = vld [vmem:[#allocation2 + $0x1c8] sm:$0xff]
        %v333 = vld [vmem:[#allocation2 + $0x1d0] sm:$0xff]
        %v334 = vld [vmem:[#allocation2 + $0x1d8] sm:$0xff]
        %v335 = vld [vmem:[#allocation2 + $0x1e0] sm:$0xff]
        %v336 = vld [vmem:[#allocation2 + $0x1e8] sm:$0xff]
        %v337 = vld [vmem:[#allocation2 + $0x1f0] sm:$0xff]
        %v338 = vld [vmem:[#allocation2 + $0x1f8] sm:$0xff]
        %v339 = vld [vmem:[%s2] sm:$0xf]
        %v341 = vperm.slane %v339, 0
        %v342 = vperm.slane %v339, 1
        %v343 = vperm.slane %v339, 2
        %v344 = vperm.slane %v339, 3
        %v413 = vunpack.c.l.b16 %v275
        %v414 = vunpack.c.h.b16 %v275
        %v415 = vunpack.c.l.b16 %v276
        %v416 = vunpack.c.h.b16 %v276
        %v417 = vunpack.c.l.b16 %v277
        %v418 = vunpack.c.h.b16 %v277
        %v419 = vunpack.c.l.b16 %v278
        %v420 = vunpack.c.h.b16 %v278
        %v421 = vunpack.c.l.b16 %v279
        %v422 = vunpack.c.h.b16 %v279
        %v423 = vunpack.c.l.b16 %v280
        %v424 = vunpack.c.h.b16 %v280
        %v425 = vunpack.c.l.b16 %v281
        %v426 = vunpack.c.h.b16 %v281
        %v427 = vunpack.c.l.b16 %v282
        %v428 = vunpack.c.h.b16 %v282
        %v429 = vunpack.c.l.b16 %v283
        %v430 = vunpack.c.h.b16 %v283
        %v431 = vunpack.c.l.b16 %v284
        %v432 = vunpack.c.h.b16 %v284
        %v433 = vunpack.c.l.b16 %v285
        %v434 = vunpack.c.h.b16 %v285
        %v435 = vunpack.c.l.b16 %v286
        %v436 = vunpack.c.h.b16 %v286
        %v437 = vunpack.c.l.b16 %v287
        %v438 = vunpack.c.h.b16 %v287
        %v439 = vunpack.c.l.b16 %v288
        %v440 = vunpack.c.h.b16 %v288
        %v441 = vunpack.c.l.b16 %v289
        %v442 = vunpack.c.h.b16 %v289
        %v443 = vunpack.c.l.b16 %v290
        %v444 = vunpack.c.h.b16 %v290
        %v445 = vunpack.c.l.b16 %v291
        %v446 = vunpack.c.h.b16 %v291
        %v447 = vunpack.c.l.b16 %v292
        %v448 = vunpack.c.h.b16 %v292
        %v449 = vunpack.c.l.b16 %v293
        %v450 = vunpack.c.h.b16 %v293
        %v451 = vunpack.c.l.b16 %v294
        %v452 = vunpack.c.h.b16 %v294
        %v453 = vunpack.c.l.b16 %v295
        %v454 = vunpack.c.h.b16 %v295
        %v455 = vunpack.c.l.b16 %v296
        %v456 = vunpack.c.h.b16 %v296
        %v457 = vunpack.c.l.b16 %v297
        %v458 = vunpack.c.h.b16 %v297
        %v459 = vunpack.c.l.b16 %v298
        %v460 = vunpack.c.h.b16 %v298
        %v461 = vunpack.c.l.b16 %v299
        %v462 = vunpack.c.h.b16 %v299
        %v463 = vunpack.c.l.b16 %v300
        %v464 = vunpack.c.h.b16 %v300
        %v465 = vunpack.c.l.b16 %v301
        %v466 = vunpack.c.h.b16 %v301
        %v467 = vunpack.c.l.b16 %v302
        %v468 = vunpack.c.h.b16 %v302
        %v469 = vunpack.c.l.b16 %v303
        %v470 = vunpack.c.h.b16 %v303
        %v471 = vunpack.c.l.b16 %v304
        %v472 = vunpack.c.h.b16 %v304
        %v473 = vunpack.c.l.b16 %v305
        %v474 = vunpack.c.h.b16 %v305
        %v475 = vunpack.c.l.b16 %v306
        %v476 = vunpack.c.h.b16 %v306
        %v477 = vunpack.c.l.b16 %v307
        %v478 = vunpack.c.h.b16 %v307
        %v479 = vunpack.c.l.b16 %v308
        %v480 = vunpack.c.h.b16 %v308
        %v481 = vunpack.c.l.b16 %v309
        %v482 = vunpack.c.h.b16 %v309
        %v483 = vunpack.c.l.b16 %v310
        %v484 = vunpack.c.h.b16 %v310
        %v485 = vunpack.c.l.b16 %v311
        %v486 = vunpack.c.h.b16 %v311
        %v487 = vunpack.c.l.b16 %v312
        %v488 = vunpack.c.h.b16 %v312
        %v489 = vunpack.c.l.b16 %v313
        %v490 = vunpack.c.h.b16 %v313
        %v491 = vunpack.c.l.b16 %v314
        %v492 = vunpack.c.h.b16 %v314
        %v493 = vunpack.c.l.b16 %v315
        %v494 = vunpack.c.h.b16 %v315
        %v495 = vunpack.c.l.b16 %v316
        %v496 = vunpack.c.h.b16 %v316
        %v497 = vunpack.c.l.b16 %v317
        %v498 = vunpack.c.h.b16 %v317
        %v499 = vunpack.c.l.b16 %v318
        %v500 = vunpack.c.h.b16 %v318
        %v501 = vunpack.c.l.b16 %v319
        %v502 = vunpack.c.h.b16 %v319
        %v503 = vunpack.c.l.b16 %v320
        %v504 = vunpack.c.h.b16 %v320
        %v505 = vunpack.c.l.b16 %v321
        %v506 = vunpack.c.h.b16 %v321
        %v507 = vunpack.c.l.b16 %v322
        %v508 = vunpack.c.h.b16 %v322
        %v509 = vunpack.c.l.b16 %v323
        %v510 = vunpack.c.h.b16 %v323
        %v511 = vunpack.c.l.b16 %v324
        %v512 = vunpack.c.h.b16 %v324
        %v513 = vunpack.c.l.b16 %v325
        %v514 = vunpack.c.h.b16 %v325
        %v515 = vunpack.c.l.b16 %v326
        %v516 = vunpack.c.h.b16 %v326
        %v517 = vunpack.c.l.b16 %v327
        %v518 = vunpack.c.h.b16 %v327
        %v519 = vunpack.c.l.b16 %v328
        %v520 = vunpack.c.h.b16 %v328
        %v521 = vunpack.c.l.b16 %v329
        %v522 = vunpack.c.h.b16 %v329
        %v523 = vunpack.c.l.b16 %v330
        %v524 = vunpack.c.h.b16 %v330
        %v525 = vunpack.c.l.b16 %v331
        %v526 = vunpack.c.h.b16 %v331
        %v527 = vunpack.c.l.b16 %v332
        %v528 = vunpack.c.h.b16 %v332
        %v529 = vunpack.c.l.b16 %v333
        %v530 = vunpack.c.h.b16 %v333
        %v531 = vunpack.c.l.b16 %v334
        %v532 = vunpack.c.h.b16 %v334
        %v533 = vunpack.c.l.b16 %v335
        %v534 = vunpack.c.h.b16 %v335
        %v535 = vunpack.c.l.b16 %v336
        %v536 = vunpack.c.h.b16 %v336
        %v537 = vunpack.c.l.b16 %v337
        %v538 = vunpack.c.h.b16 %v337
        %v539 = vunpack.c.l.b16 %v338
        %v540 = vunpack.c.h.b16 %v338
        %v541 = vpack.c.b16 %v417, %v413
        %v542 = vpack.c.b16 %v418, %v414
        %v543 = vpack.c.b16 %v419, %v415
        %v544 = vpack.c.b16 %v420, %v416
        %v545 = vpack.c.b16 %v425, %v421
        %v546 = vpack.c.b16 %v426, %v422
        %v547 = vpack.c.b16 %v427, %v423
        %v548 = vpack.c.b16 %v428, %v424
        %v549 = vpack.c.b16 %v433, %v429
        %v550 = vpack.c.b16 %v434, %v430
        %v551 = vpack.c.b16 %v435, %v431
        %v552 = vpack.c.b16 %v436, %v432
        %v553 = vpack.c.b16 %v441, %v437
        %v554 = vpack.c.b16 %v442, %v438
        %v555 = vpack.c.b16 %v443, %v439
        %v556 = vpack.c.b16 %v444, %v440
        %v557 = vpack.c.b16 %v449, %v445
        %v558 = vpack.c.b16 %v450, %v446
        %v559 = vpack.c.b16 %v451, %v447
        %v560 = vpack.c.b16 %v452, %v448
        %v561 = vpack.c.b16 %v457, %v453
        %v562 = vpack.c.b16 %v458, %v454
        %v563 = vpack.c.b16 %v459, %v455
        %v564 = vpack.c.b16 %v460, %v456
        %v565 = vpack.c.b16 %v465, %v461
        %v566 = vpack.c.b16 %v466, %v462
        %v567 = vpack.c.b16 %v467, %v463
        %v568 = vpack.c.b16 %v468, %v464
        %v569 = vpack.c.b16 %v473, %v469
        %v570 = vpack.c.b16 %v474, %v470
        %v571 = vpack.c.b16 %v475, %v471
        %v572 = vpack.c.b16 %v476, %v472
        %v573 = vpack.c.b16 %v481, %v477
        %v574 = vpack.c.b16 %v482, %v478
        %v575 = vpack.c.b16 %v483, %v479
        %v576 = vpack.c.b16 %v484, %v480
        %v577 = vpack.c.b16 %v489, %v485
        %v578 = vpack.c.b16 %v490, %v486
        %v579 = vpack.c.b16 %v491, %v487
        %v580 = vpack.c.b16 %v492, %v488
        %v581 = vpack.c.b16 %v497, %v493
        %v582 = vpack.c.b16 %v498, %v494
        %v583 = vpack.c.b16 %v499, %v495
        %v584 = vpack.c.b16 %v500, %v496
        %v585 = vpack.c.b16 %v505, %v501
        %v586 = vpack.c.b16 %v506, %v502
        %v587 = vpack.c.b16 %v507, %v503
        %v588 = vpack.c.b16 %v508, %v504
        %v589 = vpack.c.b16 %v513, %v509
        %v590 = vpack.c.b16 %v514, %v510
        %v591 = vpack.c.b16 %v515, %v511
        %v592 = vpack.c.b16 %v516, %v512
        %v593 = vpack.c.b16 %v521, %v517
        %v594 = vpack.c.b16 %v522, %v518
        %v595 = vpack.c.b16 %v523, %v519
        %v596 = vpack.c.b16 %v524, %v520
        %v597 = vpack.c.b16 %v529, %v525
        %v598 = vpack.c.b16 %v530, %v526
        %v599 = vpack.c.b16 %v531, %v527
        %v600 = vpack.c.b16 %v532, %v528
        %v601 = vpack.c.b16 %v537, %v533
        %v602 = vpack.c.b16 %v538, %v534
        %v603 = vpack.c.b16 %v539, %v535
        %v604 = vpack.c.b16 %v540, %v536
        %669 = vmatpush.bf16.msra.mxu0 %v569
        %670 = vmatpush.bf16.msra.mxu0 %v565
        %671 = vmatpush.bf16.msra.mxu0 %v561
        %672 = vmatpush.bf16.msra.mxu0 %v557
        %673 = vmatpush.bf16.msra.mxu0 %v553
        %674 = vmatpush.bf16.msra.mxu0 %v549
        %675 = vmatpush.bf16.msra.mxu0 %v545
        %676 = vmatpush.bf16.msra.mxu0 %v541
        %677 = vmatmul.bf16.gmra.mxu0 %v265
        %v678 = vpop.f32.mrf.mxu0
        %v679 = vadd.f32 %v341, %v678
        %v680 = vpop.f32.mrf.mxu0
        %v681 = vadd.f32 %v341, %v680
        %682 = vdwg.mxu0
        %683 = vmatpush.bf16.msra.mxu0 %v601
        %684 = vmatpush.bf16.msra.mxu0 %v597
        %685 = vmatpush.bf16.msra.mxu0 %v593
        %686 = vmatpush.bf16.msra.mxu0 %v589
        %687 = vmatpush.bf16.msra.mxu0 %v585
        %688 = vmatpush.bf16.msra.mxu0 %v581
        %689 = vmatpush.bf16.msra.mxu0 %v577
        %690 = vmatpush.bf16.msra.mxu0 %v573
        %691 = vmatmul.bf16.gmra.mxu0 %v273
        %v692 = vpop.f32.mrf.mxu0
        %v693 = vadd.f32 %v679, %v692
        %v694 = vpop.f32.mrf.mxu0
        %v695 = vadd.f32 %v681, %v694
        %696 = vdwg.mxu0
        %697 = vmatpush.bf16.msra.mxu0 %v570
        %698 = vmatpush.bf16.msra.mxu0 %v566
        %699 = vmatpush.bf16.msra.mxu0 %v562
        %700 = vmatpush.bf16.msra.mxu0 %v558
        %701 = vmatpush.bf16.msra.mxu0 %v554
        %702 = vmatpush.bf16.msra.mxu0 %v550
        %703 = vmatpush.bf16.msra.mxu0 %v546
        %704 = vmatpush.bf16.msra.mxu0 %v542
        %705 = vmatmul.bf16.gmra.mxu0 %v265
        %v706 = vpop.f32.mrf.mxu0
        %v707 = vadd.f32 %v342, %v706
        %v708 = vpop.f32.mrf.mxu0
        %v709 = vadd.f32 %v342, %v708
        %710 = vdwg.mxu0
        %711 = vmatpush.bf16.msra.mxu0 %v602
        %712 = vmatpush.bf16.msra.mxu0 %v598
        %713 = vmatpush.bf16.msra.mxu0 %v594
        %714 = vmatpush.bf16.msra.mxu0 %v590
        %715 = vmatpush.bf16.msra.mxu0 %v586
        %716 = vmatpush.bf16.msra.mxu0 %v582
        %717 = vmatpush.bf16.msra.mxu0 %v578
        %718 = vmatpush.bf16.msra.mxu0 %v574
        %719 = vmatmul.bf16.gmra.mxu0 %v273
        %v720 = vpop.f32.mrf.mxu0
        %v721 = vadd.f32 %v707, %v720
        %v722 = vpop.f32.mrf.mxu0
        %v723 = vadd.f32 %v709, %v722
        %724 = vdwg.mxu0
        %725 = vmatpush.bf16.msra.mxu0 %v571
        %726 = vmatpush.bf16.msra.mxu0 %v567
        %727 = vmatpush.bf16.msra.mxu0 %v563
        %728 = vmatpush.bf16.msra.mxu0 %v559
        %729 = vmatpush.bf16.msra.mxu0 %v555
        %730 = vmatpush.bf16.msra.mxu0 %v551
        %731 = vmatpush.bf16.msra.mxu0 %v547
        %732 = vmatpush.bf16.msra.mxu0 %v543
        %733 = vmatmul.bf16.gmra.mxu0 %v265
        %v734 = vpop.f32.mrf.mxu0
        %v735 = vadd.f32 %v343, %v734
        %v736 = vpop.f32.mrf.mxu0
        %v737 = vadd.f32 %v343, %v736
        %738 = vdwg.mxu0
        %739 = vmatpush.bf16.msra.mxu0 %v603
        %740 = vmatpush.bf16.msra.mxu0 %v599
        %741 = vmatpush.bf16.msra.mxu0 %v595
        %742 = vmatpush.bf16.msra.mxu0 %v591
        %743 = vmatpush.bf16.msra.mxu0 %v587
        %744 = vmatpush.bf16.msra.mxu0 %v583
        %745 = vmatpush.bf16.msra.mxu0 %v579
        %746 = vmatpush.bf16.msra.mxu0 %v575
        %747 = vmatmul.bf16.gmra.mxu0 %v273
        %v748 = vpop.f32.mrf.mxu0
        %v749 = vadd.f32 %v735, %v748
        %v750 = vpop.f32.mrf.mxu0
        %v751 = vadd.f32 %v737, %v750
        %752 = vdwg.mxu0
        %753 = vmatpush.bf16.msra.mxu0 %v572
        %754 = vmatpush.bf16.msra.mxu0 %v568
        %755 = vmatpush.bf16.msra.mxu0 %v564
        %756 = vmatpush.bf16.msra.mxu0 %v560
        %757 = vmatpush.bf16.msra.mxu0 %v556
        %758 = vmatpush.bf16.msra.mxu0 %v552
        %759 = vmatpush.bf16.msra.mxu0 %v548
        %760 = vmatpush.bf16.msra.mxu0 %v544
        %761 = vmatmul.bf16.gmra.mxu0 %v265
        %v762 = vpop.f32.mrf.mxu0
        %v763 = vadd.f32 %v344, %v762
        %v764 = vpop.f32.mrf.mxu0
        %v765 = vadd.f32 %v344, %v764
        %766 = vdwg.mxu0
        %767 = vmatpush.bf16.msra.mxu0 %v604
        %768 = vmatpush.bf16.msra.mxu0 %v600
        %769 = vmatpush.bf16.msra.mxu0 %v596
        %770 = vmatpush.bf16.msra.mxu0 %v592
        %771 = vmatpush.bf16.msra.mxu0 %v588
        %772 = vmatpush.bf16.msra.mxu0 %v584
        %773 = vmatpush.bf16.msra.mxu0 %v580
        %774 = vmatpush.bf16.msra.mxu0 %v576
        %775 = vmatmul.bf16.gmra.mxu0 %v273
        %v776 = vpop.f32.mrf.mxu0
        %v777 = vadd.f32 %v763, %v776
        %v778 = vpop.f32.mrf.mxu0
        %v779 = vadd.f32 %v765, %v778
        %780 = vdwg.mxu0
        %v781 = vmax.f32 %v693, 0.0
        %v782 = vmax.f32 %v721, 0.0
        %v783 = vmax.f32 %v749, 0.0
        %v784 = vmax.f32 %v777, 0.0
        %v785 = vmax.f32 %v695, 0.0
        %v786 = vmax.f32 %v723, 0.0
        %v787 = vmax.f32 %v751, 0.0
        %v788 = vmax.f32 %v779, 0.0
        %v789 = vpack.c.bf16 %v782, %v781
        %v790 = vpack.c.bf16 %v784, %v783
        %v791 = vpack.c.bf16 %v786, %v785
        %v792 = vpack.c.bf16 %v788, %v787
        %v795 = vrot.slane %v789, 3
        %v796 = vrot.slane %v791, 3
        %vm797 = vcmask 1040384
        %v800 = vsel %vm797, %v789, %v795
        %vm802 = vcmask 1041409
        %v803 = vsel %vm802, %v789, %v795
        %v805 = vrot.slane %v803, 1
        %vm806 = vcmask 1042434
        %v807 = vsel %vm806, %v789, %v795
        %v809 = vrot.slane %v807, 2
        %vm810 = vcmask 1043459
        %v811 = vsel %vm810, %v789, %v795
        %v813 = vrot.slane %v811, 3
        %v816 = vsel %vm797, %v791, %v796
        %v818 = vsel %vm802, %v791, %v796
        %v820 = vrot.slane %v818, 1
        %v821 = vsel %vm806, %v791, %v796
        %v823 = vrot.slane %v821, 2
        %v824 = vsel %vm810, %v791, %v796
        %v826 = vrot.slane %v824, 3
        %v827 = vunpack.i.l.s16 %v800
        %v828 = vunpack.i.h.s16 %v800
        %v829 = vunpack.i.l.s16 %v805
        %v830 = vunpack.i.h.s16 %v805
        %v831 = vunpack.i.l.s16 %v809
        %v832 = vunpack.i.h.s16 %v809
        %v833 = vunpack.i.l.s16 %v813
        %v834 = vunpack.i.h.s16 %v813
        %v835 = vunpack.i.l.s16 %v816
        %v836 = vunpack.i.h.s16 %v816
        %v837 = vunpack.i.l.s16 %v820
        %v838 = vunpack.i.h.s16 %v820
        %v839 = vunpack.i.l.s16 %v823
        %v840 = vunpack.i.h.s16 %v823
        %v841 = vunpack.i.l.s16 %v826
        %v844 = vrot.slane %v790, 3
        %v845 = vrot.slane %v792, 3
        %v848 = vsel %vm797, %v790, %v844
        %v850 = vsel %vm802, %v790, %v844
        %v852 = vrot.slane %v850, 1
        %v853 = vsel %vm806, %v790, %v844
        %v855 = vrot.slane %v853, 2
        %v856 = vsel %vm810, %v790, %v844
        %v858 = vrot.slane %v856, 3
        %v861 = vsel %vm797, %v792, %v845
        %v863 = vsel %vm802, %v792, %v845
        %v865 = vrot.slane %v863, 1
        %v866 = vsel %vm806, %v792, %v845
        %v868 = vrot.slane %v866, 2
        %v869 = vsel %vm810, %v792, %v845
        %v871 = vrot.slane %v869, 3
        %v872 = vunpack.i.l.s16 %v848
        %v873 = vunpack.i.h.s16 %v848
        %v874 = vunpack.i.l.s16 %v852
        %v875 = vunpack.i.h.s16 %v852
        %v876 = vunpack.i.l.s16 %v855
        %v877 = vunpack.i.h.s16 %v855
        %v878 = vunpack.i.l.s16 %v858
        %v879 = vunpack.i.h.s16 %v858
        %v880 = vunpack.i.l.s16 %v861
        %v881 = vunpack.i.h.s16 %v861
        %v882 = vunpack.i.l.s16 %v865
        %v883 = vunpack.i.h.s16 %v865
        %v884 = vunpack.i.l.s16 %v868
        %v885 = vunpack.i.h.s16 %v868
        %v886 = vunpack.i.l.s16 %v871
        %v887 = vpack.i.b16 %v827, %v827
        %v888 = vpack.i.b16 %v828, %v828
        %v889 = vpack.i.b16 %v829, %v829
        %v890 = vpack.i.b16 %v830, %v830
        %v891 = vpack.i.b16 %v831, %v831
        %v892 = vpack.i.b16 %v832, %v832
        %v893 = vpack.i.b16 %v833, %v833
        %v894 = vpack.i.b16 %v834, %v834
        %v895 = vpack.i.b16 %v835, %v835
        %v896 = vpack.i.b16 %v836, %v836
        %v897 = vpack.i.b16 %v837, %v837
        %v898 = vpack.i.b16 %v838, %v838
        %v899 = vpack.i.b16 %v839, %v839
        %v900 = vpack.i.b16 %v840, %v840
        %v901 = vpack.i.b16 %v841, %v841
        %v902 = vperm.slane %v887, 0
        %v903 = vperm.slane %v887, 1
        %v904 = vperm.slane %v888, 0
        %v905 = vperm.slane %v888, 1
        %v906 = vperm.slane %v889, 0
        %v907 = vperm.slane %v889, 1
        %v908 = vperm.slane %v890, 0
        %v909 = vperm.slane %v890, 1
        %v910 = vperm.slane %v891, 0
        %v911 = vperm.slane %v891, 1
        %v912 = vperm.slane %v892, 0
        %v913 = vperm.slane %v892, 1
        %v914 = vperm.slane %v893, 0
        %v915 = vperm.slane %v893, 1
        %v916 = vperm.slane %v894, 0
        %v917 = vperm.slane %v894, 1
        %v918 = vperm.slane %v895, 0
        %v919 = vperm.slane %v895, 1
        %v920 = vperm.slane %v896, 0
        %v921 = vperm.slane %v896, 1
        %v922 = vperm.slane %v897, 0
        %v923 = vperm.slane %v897, 1
        %v924 = vperm.slane %v898, 0
        %v925 = vperm.slane %v898, 1
        %v926 = vperm.slane %v899, 0
        %v927 = vperm.slane %v899, 1
        %v928 = vperm.slane %v900, 0
        %v929 = vperm.slane %v900, 1
        %v930 = vperm.slane %v901, 0
        %v931 = vperm.slane %v901, 1
        %v962 = vpack.i.b16 %v872, %v872
        %v963 = vpack.i.b16 %v873, %v873
        %v964 = vpack.i.b16 %v874, %v874
        %v965 = vpack.i.b16 %v875, %v875
        %v966 = vpack.i.b16 %v876, %v876
        %v967 = vpack.i.b16 %v877, %v877
        %v968 = vpack.i.b16 %v878, %v878
        %v969 = vpack.i.b16 %v879, %v879
        %v970 = vpack.i.b16 %v880, %v880
        %v971 = vpack.i.b16 %v881, %v881
        %v972 = vpack.i.b16 %v882, %v882
        %v973 = vpack.i.b16 %v883, %v883
        %v974 = vpack.i.b16 %v884, %v884
        %v975 = vpack.i.b16 %v885, %v885
        %v976 = vpack.i.b16 %v886, %v886
        %v977 = vperm.slane %v962, 0
        %v978 = vperm.slane %v962, 1
        %v979 = vperm.slane %v963, 0
        %v980 = vperm.slane %v963, 1
        %v981 = vperm.slane %v964, 0
        %v982 = vperm.slane %v964, 1
        %v983 = vperm.slane %v965, 0
        %v984 = vperm.slane %v965, 1
        %v985 = vperm.slane %v966, 0
        %v986 = vperm.slane %v966, 1
        %v987 = vperm.slane %v967, 0
        %v988 = vperm.slane %v967, 1
        %v989 = vperm.slane %v968, 0
        %v990 = vperm.slane %v968, 1
        %v991 = vperm.slane %v969, 0
        %v992 = vperm.slane %v969, 1
        %v993 = vperm.slane %v970, 0
        %v994 = vperm.slane %v970, 1
        %v995 = vperm.slane %v971, 0
        %v996 = vperm.slane %v971, 1
        %v997 = vperm.slane %v972, 0
        %v998 = vperm.slane %v972, 1
        %v999 = vperm.slane %v973, 0
        %v1000 = vperm.slane %v973, 1
        %v1001 = vperm.slane %v974, 0
        %v1002 = vperm.slane %v974, 1
        %v1003 = vperm.slane %v975, 0
        %v1004 = vperm.slane %v975, 1
        %v1005 = vperm.slane %v976, 0
        %v1006 = vperm.slane %v976, 1
        %vm1037 = vcmask 1040384
        %vm1038 = vsmask.f32 256
        %vm1039 = vmand %vm1037, %vm1038
        %v1040 = vsel %vm1039, %v902, %v977
        %v1041 = vsel %vm1039, %v903, %v978
        %v1042 = vsel %vm1039, %v904, %v979
        %v1043 = vsel %vm1039, %v905, %v980
        %v1044 = vsel %vm1039, %v906, %v981
        %v1045 = vsel %vm1039, %v907, %v982
        %v1046 = vsel %vm1039, %v908, %v983
        %v1047 = vsel %vm1039, %v909, %v984
        %v1048 = vsel %vm1039, %v910, %v985
        %v1049 = vsel %vm1039, %v911, %v986
        %v1050 = vsel %vm1039, %v912, %v987
        %v1051 = vsel %vm1039, %v913, %v988
        %v1052 = vsel %vm1039, %v914, %v989
        %v1053 = vsel %vm1039, %v915, %v990
        %v1054 = vsel %vm1039, %v916, %v991
        %v1055 = vsel %vm1039, %v917, %v992
        %v1056 = vsel %vm1039, %v918, %v993
        %v1057 = vsel %vm1039, %v919, %v994
        %v1058 = vsel %vm1039, %v920, %v995
        %v1059 = vsel %vm1039, %v921, %v996
        %v1060 = vsel %vm1039, %v922, %v997
        %v1061 = vsel %vm1039, %v923, %v998
        %v1062 = vsel %vm1039, %v924, %v999
        %v1063 = vsel %vm1039, %v925, %v1000
        %v1064 = vsel %vm1039, %v926, %v1001
        %v1065 = vsel %vm1039, %v927, %v1002
        %v1066 = vsel %vm1039, %v928, %v1003
        %v1067 = vsel %vm1039, %v929, %v1004
        %v1068 = vsel %vm1039, %v930, %v1005
        %v1069 = vsel %vm1039, %v931, %v1006
        %v1085 = vrot.slane %v1041, 7
        %v1086 = vrot.slane %v1043, 7
        %v1087 = vrot.slane %v1045, 7
        %v1088 = vrot.slane %v1047, 7
        %v1089 = vrot.slane %v1049, 7
        %v1090 = vrot.slane %v1051, 7
        %v1091 = vrot.slane %v1053, 7
        %v1092 = vrot.slane %v1055, 7
        %v1093 = vrot.slane %v1057, 7
        %v1094 = vrot.slane %v1059, 7
        %v1095 = vrot.slane %v1061, 7
        %v1096 = vrot.slane %v1063, 7
        %v1097 = vrot.slane %v1065, 7
        %v1098 = vrot.slane %v1067, 7
        %v1099 = vrot.slane %v1069, 7
        %v1102 = vsel %vm797, %v1040, %v1085
        %v1105 = vsel %vm797, %v1042, %v1086
        %v1108 = vsel %vm797, %v1044, %v1087
        %v1111 = vsel %vm797, %v1046, %v1088
        %v1114 = vsel %vm797, %v1048, %v1089
        %v1117 = vsel %vm797, %v1050, %v1090
        %v1120 = vsel %vm797, %v1052, %v1091
        %v1123 = vsel %vm797, %v1054, %v1092
        %v1126 = vsel %vm797, %v1056, %v1093
        %v1129 = vsel %vm797, %v1058, %v1094
        %v1132 = vsel %vm797, %v1060, %v1095
        %v1135 = vsel %vm797, %v1062, %v1096
        %v1138 = vsel %vm797, %v1064, %v1097
        %v1141 = vsel %vm797, %v1066, %v1098
        %v1144 = vsel %vm797, %v1068, %v1099
        %1145 = vst [vmem:[#allocation1] ss:$9 sm:$0xff] %v1102
        %s1146 = scalar_lea.vmem [#allocation1], 1
        %1147 = vst [vmem:[%s1146] ss:$9 sm:$0xff] %v1105
        %s1148 = scalar_lea.vmem [#allocation1], 2
        %1149 = vst [vmem:[%s1148] ss:$9 sm:$0xff] %v1108
        %s1150 = scalar_lea.vmem [#allocation1], 3
        %1151 = vst [vmem:[%s1150] ss:$9 sm:$0xff] %v1111
        %s1152 = scalar_lea.vmem [#allocation1], 4
        %1153 = vst [vmem:[%s1152] ss:$9 sm:$0xff] %v1114
        %s1154 = scalar_lea.vmem [#allocation1], 5
        %1155 = vst [vmem:[%s1154] ss:$9 sm:$0xff] %v1117
        %s1156 = scalar_lea.vmem [#allocation1], 6
        %1157 = vst [vmem:[%s1156] ss:$9 sm:$0xff] %v1120
        %s1158 = scalar_lea.vmem [#allocation1], 7
        %1159 = vst [vmem:[%s1158] ss:$9 sm:$0xff] %v1123
        %v1160 = vld [vmem:[#allocation1] sm:$0xff]
        %v1161 = vld [vmem:[#allocation1 + $0x9] sm:$0xff]
        %1162 = vst [vmem:[#allocation1] ss:$9 sm:$0xff] %v1126
        %1163 = vst [vmem:[%s1146] ss:$9 sm:$0xff] %v1129
        %1164 = vst [vmem:[%s1148] ss:$9 sm:$0xff] %v1132
        %1165 = vst [vmem:[%s1150] ss:$9 sm:$0xff] %v1135
        %1166 = vst [vmem:[%s1152] ss:$9 sm:$0xff] %v1138
        %1167 = vst [vmem:[%s1154] ss:$9 sm:$0xff] %v1141
        %v1168 = vld [vmem:[#allocation1] sm:$0xff]
        %v1169 = vld [vmem:[#allocation1 + $0x9] sm:$0xff]
        %1174 = vst [vmem:[#allocation1] ss:$9 sm:$0xff] %v1102
        %s1175 = scalar_lea.vmem [#allocation1], 1
        %1176 = vst [vmem:[%s1175] ss:$9 sm:$0xff] %v1105
        %s1177 = scalar_lea.vmem [#allocation1], 2
        %1178 = vst [vmem:[%s1177] ss:$9 sm:$0xff] %v1108
        %s1179 = scalar_lea.vmem [#allocation1], 3
        %1180 = vst [vmem:[%s1179] ss:$9 sm:$0xff] %v1111
        %s1181 = scalar_lea.vmem [#allocation1], 4
        %1182 = vst [vmem:[%s1181] ss:$9 sm:$0xff] %v1114
        %s1183 = scalar_lea.vmem [#allocation1], 5
        %1184 = vst [vmem:[%s1183] ss:$9 sm:$0xff] %v1117
        %s1185 = scalar_lea.vmem [#allocation1], 6
        %1186 = vst [vmem:[%s1185] ss:$9 sm:$0xff] %v1120
        %s1187 = scalar_lea.vmem [#allocation1], 7
        %1188 = vst [vmem:[%s1187] ss:$9 sm:$0xff] %v1123
        %v1189 = vld [vmem:[#allocation1] sm:$0xff]
        %v1190 = vld [vmem:[#allocation1 + $0x9] sm:$0xff]
        %1191 = vst [vmem:[#allocation1] ss:$9 sm:$0xff] %v1126
        %1192 = vst [vmem:[%s1175] ss:$9 sm:$0xff] %v1129
        %1193 = vst [vmem:[%s1177] ss:$9 sm:$0xff] %v1132
        %1194 = vst [vmem:[%s1179] ss:$9 sm:$0xff] %v1135
        %1195 = vst [vmem:[%s1181] ss:$9 sm:$0xff] %v1138
        %1196 = vst [vmem:[%s1183] ss:$9 sm:$0xff] %v1141
        %1197 = vst [vmem:[%s1185] ss:$9 sm:$0xff] %v1144
        %v1198 = vld [vmem:[#allocation1] sm:$0xff]
        %v1199 = vld [vmem:[#allocation1 + $0x9] sm:$0xff]
        %vm1200 = vsmask.f32 7424
        %v1201 = vshrl.u32 %v1189, 16
        %v1203 = vshll.u32 %v1189, 16
        %v1205 = vrot.slane %v1203, 1
        %v1206 = vor.u32 %v1201, %v1205
        %v1207 = vshll.u32 %v1198, 16
        %v1209 = vrot.slane %v1207, 1
        %v1210 = vsel %vm1200, %v1206, %v1209
        %v1211 = vshrl.u32 %v1190, 16
        %v1213 = vshll.u32 %v1190, 16
        %v1215 = vrot.slane %v1213, 1
        %v1216 = vor.u32 %v1211, %v1215
        %v1217 = vshll.u32 %v1199, 16
        %v1219 = vrot.slane %v1217, 1
        %v1220 = vsel %vm1200, %v1216, %v1219
        %v1221 = vshrl.u32 %v1198, 16
        %v1223 = vor.u32 %v1221, %v1209
        %v1224 = vshrl.u32 %v1199, 16
        %v1226 = vor.u32 %v1224, %v1219
        %1231 = vst [vmem:[#allocation1] ss:$9 sm:$0xff] %v1105
        %s1232 = scalar_lea.vmem [#allocation1], 1
        %1233 = vst [vmem:[%s1232] ss:$9 sm:$0xff] %v1108
        %s1234 = scalar_lea.vmem [#allocation1], 2
        %1235 = vst [vmem:[%s1234] ss:$9 sm:$0xff] %v1111
        %s1236 = scalar_lea.vmem [#allocation1], 3
        %1237 = vst [vmem:[%s1236] ss:$9 sm:$0xff] %v1114
        %s1238 = scalar_lea.vmem [#allocation1], 4
        %1239 = vst [vmem:[%s1238] ss:$9 sm:$0xff] %v1117
        %s1240 = scalar_lea.vmem [#allocation1], 5
        %1241 = vst [vmem:[%s1240] ss:$9 sm:$0xff] %v1120
        %s1242 = scalar_lea.vmem [#allocation1], 6
        %1243 = vst [vmem:[%s1242] ss:$9 sm:$0xff] %v1123
        %s1244 = scalar_lea.vmem [#allocation1], 7
        %1245 = vst [vmem:[%s1244] ss:$9 sm:$0xff] %v1126
        %v1246 = vld [vmem:[#allocation1] sm:$0xff]
        %v1247 = vld [vmem:[#allocation1 + $0x9] sm:$0xff]
        %1248 = vst [vmem:[#allocation1] ss:$9 sm:$0xff] %v1129
        %1249 = vst [vmem:[%s1232] ss:$9 sm:$0xff] %v1132
        %1250 = vst [vmem:[%s1234] ss:$9 sm:$0xff] %v1135
        %1251 = vst [vmem:[%s1236] ss:$9 sm:$0xff] %v1138
        %1252 = vst [vmem:[%s1238] ss:$9 sm:$0xff] %v1141
        %1253 = vst [vmem:[%s1240] ss:$9 sm:$0xff] %v1144
        %v1254 = vld [vmem:[#allocation1] sm:$0xff]
        %v1255 = vld [vmem:[#allocation1 + $0x9] sm:$0xff]
        %v1260 = vld [vmem:[#allocation4] sm:$0xff]
        %v1261 = vld [vmem:[#allocation4 + $0x8] sm:$0xff]
        %v1262 = vld [vmem:[#allocation4 + $0x10] sm:$0xff]
        %v1263 = vld [vmem:[#allocation4 + $0x18] sm:$0xff]
        %v1264 = vld [vmem:[#allocation4 + $0x20] sm:$0xff]
        %v1265 = vld [vmem:[#allocation4 + $0x28] sm:$0xff]
        %v1266 = vld [vmem:[#allocation4 + $0x30] sm:$0xff]
        %v1267 = vld [vmem:[#allocation4 + $0x38] sm:$0xff]
        %v1268 = vld [vmem:[#allocation4 + $0x40] sm:$0xff]
        %v1269 = vld [vmem:[#allocation4 + $0x48] sm:$0xff]
        %v1270 = vld [vmem:[#allocation4 + $0x50] sm:$0xff]
        %v1271 = vld [vmem:[#allocation4 + $0x58] sm:$0xff]
        %v1272 = vld [vmem:[#allocation4 + $0x60] sm:$0xff]
        %v1273 = vld [vmem:[#allocation4 + $0x68] sm:$0xff]
        %v1274 = vld [vmem:[#allocation4 + $0x70] sm:$0xff]
        %v1275 = vld [vmem:[#allocation4 + $0x78] sm:$0xff]
        %v1276 = vld [vmem:[#allocation4 + $0x80] sm:$0xff]
        %v1277 = vld [vmem:[#allocation4 + $0x88] sm:$0xff]
        %v1278 = vld [vmem:[#allocation4 + $0x90] sm:$0xff]
        %v1279 = vld [vmem:[#allocation4 + $0x98] sm:$0xff]
        %v1280 = vld [vmem:[#allocation4 + $0xa0] sm:$0xff]
        %v1281 = vld [vmem:[#allocation4 + $0xa8] sm:$0xff]
        %v1282 = vld [vmem:[#allocation4 + $0xb0] sm:$0xff]
        %v1283 = vld [vmem:[#allocation4 + $0xb8] sm:$0xff]
        %v1284 = vld [vmem:[#allocation4 + $0xc0] sm:$0xff]
        %v1285 = vld [vmem:[#allocation4 + $0xc8] sm:$0xff]
        %v1286 = vld [vmem:[#allocation4 + $0xd0] sm:$0xff]
        %v1287 = vld [vmem:[#allocation4 + $0xd8] sm:$0xff]
        %v1288 = vld [vmem:[#allocation4 + $0xe0] sm:$0xff]
        %v1289 = vld [vmem:[#allocation4 + $0xe8] sm:$0xff]
        %v1290 = vld [vmem:[#allocation4 + $0xf0] sm:$0xff]
        %v1291 = vld [vmem:[#allocation4 + $0xf8] sm:$0xff]
        %v1292 = vld [vmem:[#allocation4 + $0x100] sm:$0xff]
        %v1293 = vld [vmem:[#allocation4 + $0x108] sm:$0xff]
        %v1294 = vld [vmem:[#allocation4 + $0x110] sm:$0xff]
        %v1295 = vld [vmem:[#allocation4 + $0x118] sm:$0xff]
        %v1296 = vld [vmem:[#allocation4 + $0x120] sm:$0xff]
        %v1297 = vld [vmem:[#allocation4 + $0x128] sm:$0xff]
        %v1298 = vld [vmem:[#allocation4 + $0x130] sm:$0xff]
        %v1299 = vld [vmem:[#allocation4 + $0x138] sm:$0xff]
        %v1300 = vld [vmem:[#allocation4 + $0x140] sm:$0xff]
        %v1301 = vld [vmem:[#allocation4 + $0x148] sm:$0xff]
        %v1302 = vld [vmem:[#allocation4 + $0x150] sm:$0xff]
        %v1303 = vld [vmem:[#allocation4 + $0x158] sm:$0xff]
        %v1304 = vld [vmem:[#allocation4 + $0x160] sm:$0xff]
        %v1305 = vld [vmem:[#allocation4 + $0x168] sm:$0xff]
        %v1306 = vld [vmem:[#allocation4 + $0x170] sm:$0xff]
        %v1307 = vld [vmem:[#allocation4 + $0x178] sm:$0xff]
        %v1308 = vld [vmem:[#allocation4 + $0x180] sm:$0xff]
        %v1309 = vld [vmem:[#allocation4 + $0x188] sm:$0xff]
        %v1310 = vld [vmem:[#allocation4 + $0x190] sm:$0xff]
        %v1311 = vld [vmem:[#allocation4 + $0x198] sm:$0xff]
        %v1312 = vld [vmem:[#allocation4 + $0x1a0] sm:$0xff]
        %v1313 = vld [vmem:[#allocation4 + $0x1a8] sm:$0xff]
        %v1314 = vld [vmem:[#allocation4 + $0x1b0] sm:$0xff]
        %v1315 = vld [vmem:[#allocation4 + $0x1b8] sm:$0xff]
        %v1316 = vld [vmem:[#allocation4 + $0x1c0] sm:$0xff]
        %v1317 = vld [vmem:[#allocation4 + $0x1c8] sm:$0xff]
        %v1318 = vld [vmem:[#allocation4 + $0x1d0] sm:$0xff]
        %v1319 = vld [vmem:[#allocation4 + $0x1d8] sm:$0xff]
        %v1320 = vld [vmem:[#allocation4 + $0x1e0] sm:$0xff]
        %v1321 = vld [vmem:[#allocation4 + $0x1e8] sm:$0xff]
        %v1322 = vld [vmem:[#allocation4 + $0x1f0] sm:$0xff]
        %v1323 = vld [vmem:[#allocation4 + $0x1f8] sm:$0xff]
        %v1324 = vld [vmem:[#allocation4 + $0x200] sm:$0xff]
        %v1325 = vld [vmem:[#allocation4 + $0x208] sm:$0xff]
        %v1326 = vld [vmem:[#allocation4 + $0x210] sm:$0xff]
        %v1327 = vld [vmem:[#allocation4 + $0x218] sm:$0xff]
        %v1328 = vld [vmem:[#allocation4 + $0x220] sm:$0xff]
        %v1329 = vld [vmem:[#allocation4 + $0x228] sm:$0xff]
        %v1330 = vld [vmem:[#allocation4 + $0x230] sm:$0xff]
        %v1331 = vld [vmem:[#allocation4 + $0x238] sm:$0xff]
        %v1332 = vld [vmem:[#allocation4 + $0x240] sm:$0xff]
        %v1333 = vld [vmem:[#allocation4 + $0x248] sm:$0xff]
        %v1334 = vld [vmem:[#allocation4 + $0x250] sm:$0xff]
        %v1335 = vld [vmem:[#allocation4 + $0x258] sm:$0xff]
        %v1336 = vld [vmem:[#allocation4 + $0x260] sm:$0xff]
        %v1337 = vld [vmem:[#allocation4 + $0x268] sm:$0xff]
        %v1338 = vld [vmem:[#allocation4 + $0x270] sm:$0xff]
        %v1339 = vld [vmem:[#allocation4 + $0x278] sm:$0xff]
        %v1340 = vld [vmem:[#allocation4 + $0x280] sm:$0xff]
        %v1341 = vld [vmem:[#allocation4 + $0x288] sm:$0xff]
        %v1342 = vld [vmem:[#allocation4 + $0x290] sm:$0xff]
        %v1343 = vld [vmem:[#allocation4 + $0x298] sm:$0xff]
        %v1344 = vld [vmem:[#allocation4 + $0x2a0] sm:$0xff]
        %v1345 = vld [vmem:[#allocation4 + $0x2a8] sm:$0xff]
        %v1346 = vld [vmem:[#allocation4 + $0x2b0] sm:$0xff]
        %v1347 = vld [vmem:[#allocation4 + $0x2b8] sm:$0xff]
        %v1348 = vld [vmem:[#allocation4 + $0x2c0] sm:$0xff]
        %v1349 = vld [vmem:[#allocation4 + $0x2c8] sm:$0xff]
        %v1350 = vld [vmem:[#allocation4 + $0x2d0] sm:$0xff]
        %v1351 = vld [vmem:[#allocation4 + $0x2d8] sm:$0xff]
        %v1352 = vld [vmem:[#allocation4 + $0x2e0] sm:$0xff]
        %v1353 = vld [vmem:[#allocation4 + $0x2e8] sm:$0xff]
        %v1354 = vld [vmem:[#allocation4 + $0x2f0] sm:$0xff]
        %v1355 = vld [vmem:[#allocation4 + $0x2f8] sm:$0xff]
        %v1356 = vld [vmem:[%s4] sm:$0x3]
        %v1358 = vperm.slane %v1356, 0
        %v1359 = vperm.slane %v1356, 1
        %v1458 = vunpack.c.l.b16 %v1260
        %v1459 = vunpack.c.h.b16 %v1260
        %v1460 = vunpack.c.l.b16 %v1261
        %v1461 = vunpack.c.h.b16 %v1261
        %v1462 = vunpack.c.l.b16 %v1262
        %v1463 = vunpack.c.h.b16 %v1262
        %v1464 = vunpack.c.l.b16 %v1263
        %v1465 = vunpack.c.h.b16 %v1263
        %v1466 = vunpack.c.l.b16 %v1264
        %v1467 = vunpack.c.h.b16 %v1264
        %v1468 = vunpack.c.l.b16 %v1265
        %v1469 = vunpack.c.h.b16 %v1265
        %v1470 = vunpack.c.l.b16 %v1266
        %v1471 = vunpack.c.h.b16 %v1266
        %v1472 = vunpack.c.l.b16 %v1267
        %v1473 = vunpack.c.h.b16 %v1267
        %v1474 = vunpack.c.l.b16 %v1268
        %v1475 = vunpack.c.h.b16 %v1268
        %v1476 = vunpack.c.l.b16 %v1269
        %v1477 = vunpack.c.h.b16 %v1269
        %v1478 = vunpack.c.l.b16 %v1270
        %v1479 = vunpack.c.h.b16 %v1270
        %v1480 = vunpack.c.l.b16 %v1271
        %v1481 = vunpack.c.h.b16 %v1271
        %v1482 = vunpack.c.l.b16 %v1272
        %v1483 = vunpack.c.h.b16 %v1272
        %v1484 = vunpack.c.l.b16 %v1273
        %v1485 = vunpack.c.h.b16 %v1273
        %v1486 = vunpack.c.l.b16 %v1274
        %v1487 = vunpack.c.h.b16 %v1274
        %v1488 = vunpack.c.l.b16 %v1275
        %v1489 = vunpack.c.h.b16 %v1275
        %v1490 = vunpack.c.l.b16 %v1276
        %v1491 = vunpack.c.h.b16 %v1276
        %v1492 = vunpack.c.l.b16 %v1277
        %v1493 = vunpack.c.h.b16 %v1277
        %v1494 = vunpack.c.l.b16 %v1278
        %v1495 = vunpack.c.h.b16 %v1278
        %v1496 = vunpack.c.l.b16 %v1279
        %v1497 = vunpack.c.h.b16 %v1279
        %v1498 = vunpack.c.l.b16 %v1280
        %v1499 = vunpack.c.h.b16 %v1280
        %v1500 = vunpack.c.l.b16 %v1281
        %v1501 = vunpack.c.h.b16 %v1281
        %v1502 = vunpack.c.l.b16 %v1282
        %v1503 = vunpack.c.h.b16 %v1282
        %v1504 = vunpack.c.l.b16 %v1283
        %v1505 = vunpack.c.h.b16 %v1283
        %v1506 = vunpack.c.l.b16 %v1284
        %v1507 = vunpack.c.h.b16 %v1284
        %v1508 = vunpack.c.l.b16 %v1285
        %v1509 = vunpack.c.h.b16 %v1285
        %v1510 = vunpack.c.l.b16 %v1286
        %v1511 = vunpack.c.h.b16 %v1286
        %v1512 = vunpack.c.l.b16 %v1287
        %v1513 = vunpack.c.h.b16 %v1287
        %v1514 = vunpack.c.l.b16 %v1288
        %v1515 = vunpack.c.h.b16 %v1288
        %v1516 = vunpack.c.l.b16 %v1289
        %v1517 = vunpack.c.h.b16 %v1289
        %v1518 = vunpack.c.l.b16 %v1290
        %v1519 = vunpack.c.h.b16 %v1290
        %v1520 = vunpack.c.l.b16 %v1291
        %v1521 = vunpack.c.h.b16 %v1291
        %v1522 = vunpack.c.l.b16 %v1292
        %v1523 = vunpack.c.h.b16 %v1292
        %v1524 = vunpack.c.l.b16 %v1293
        %v1525 = vunpack.c.h.b16 %v1293
        %v1526 = vunpack.c.l.b16 %v1294
        %v1527 = vunpack.c.h.b16 %v1294
        %v1528 = vunpack.c.l.b16 %v1295
        %v1529 = vunpack.c.h.b16 %v1295
        %v1530 = vunpack.c.l.b16 %v1296
        %v1531 = vunpack.c.h.b16 %v1296
        %v1532 = vunpack.c.l.b16 %v1297
        %v1533 = vunpack.c.h.b16 %v1297
        %v1534 = vunpack.c.l.b16 %v1298
        %v1535 = vunpack.c.h.b16 %v1298
        %v1536 = vunpack.c.l.b16 %v1299
        %v1537 = vunpack.c.h.b16 %v1299
        %v1538 = vunpack.c.l.b16 %v1300
        %v1539 = vunpack.c.h.b16 %v1300
        %v1540 = vunpack.c.l.b16 %v1301
        %v1541 = vunpack.c.h.b16 %v1301
        %v1542 = vunpack.c.l.b16 %v1302
        %v1543 = vunpack.c.h.b16 %v1302
        %v1544 = vunpack.c.l.b16 %v1303
        %v1545 = vunpack.c.h.b16 %v1303
        %v1546 = vunpack.c.l.b16 %v1304
        %v1547 = vunpack.c.h.b16 %v1304
        %v1548 = vunpack.c.l.b16 %v1305
        %v1549 = vunpack.c.h.b16 %v1305
        %v1550 = vunpack.c.l.b16 %v1306
        %v1551 = vunpack.c.h.b16 %v1306
        %v1552 = vunpack.c.l.b16 %v1307
        %v1553 = vunpack.c.h.b16 %v1307
        %v1554 = vunpack.c.l.b16 %v1308
        %v1555 = vunpack.c.h.b16 %v1308
        %v1556 = vunpack.c.l.b16 %v1309
        %v1557 = vunpack.c.h.b16 %v1309
        %v1558 = vunpack.c.l.b16 %v1310
        %v1559 = vunpack.c.h.b16 %v1310
        %v1560 = vunpack.c.l.b16 %v1311
        %v1561 = vunpack.c.h.b16 %v1311
        %v1562 = vunpack.c.l.b16 %v1312
        %v1563 = vunpack.c.h.b16 %v1312
        %v1564 = vunpack.c.l.b16 %v1313
        %v1565 = vunpack.c.h.b16 %v1313
        %v1566 = vunpack.c.l.b16 %v1314
        %v1567 = vunpack.c.h.b16 %v1314
        %v1568 = vunpack.c.l.b16 %v1315
        %v1569 = vunpack.c.h.b16 %v1315
        %v1570 = vunpack.c.l.b16 %v1316
        %v1571 = vunpack.c.h.b16 %v1316
        %v1572 = vunpack.c.l.b16 %v1317
        %v1573 = vunpack.c.h.b16 %v1317
        %v1574 = vunpack.c.l.b16 %v1318
        %v1575 = vunpack.c.h.b16 %v1318
        %v1576 = vunpack.c.l.b16 %v1319
        %v1577 = vunpack.c.h.b16 %v1319
        %v1578 = vunpack.c.l.b16 %v1320
        %v1579 = vunpack.c.h.b16 %v1320
        %v1580 = vunpack.c.l.b16 %v1321
        %v1581 = vunpack.c.h.b16 %v1321
        %v1582 = vunpack.c.l.b16 %v1322
        %v1583 = vunpack.c.h.b16 %v1322
        %v1584 = vunpack.c.l.b16 %v1323
        %v1585 = vunpack.c.h.b16 %v1323
        %v1586 = vunpack.c.l.b16 %v1324
        %v1587 = vunpack.c.h.b16 %v1324
        %v1588 = vunpack.c.l.b16 %v1325
        %v1589 = vunpack.c.h.b16 %v1325
        %v1590 = vunpack.c.l.b16 %v1326
        %v1591 = vunpack.c.h.b16 %v1326
        %v1592 = vunpack.c.l.b16 %v1327
        %v1593 = vunpack.c.h.b16 %v1327
        %v1594 = vunpack.c.l.b16 %v1328
        %v1595 = vunpack.c.h.b16 %v1328
        %v1596 = vunpack.c.l.b16 %v1329
        %v1597 = vunpack.c.h.b16 %v1329
        %v1598 = vunpack.c.l.b16 %v1330
        %v1599 = vunpack.c.h.b16 %v1330
        %v1600 = vunpack.c.l.b16 %v1331
        %v1601 = vunpack.c.h.b16 %v1331
        %v1602 = vunpack.c.l.b16 %v1332
        %v1603 = vunpack.c.h.b16 %v1332
        %v1604 = vunpack.c.l.b16 %v1333
        %v1605 = vunpack.c.h.b16 %v1333
        %v1606 = vunpack.c.l.b16 %v1334
        %v1607 = vunpack.c.h.b16 %v1334
        %v1608 = vunpack.c.l.b16 %v1335
        %v1609 = vunpack.c.h.b16 %v1335
        %v1610 = vunpack.c.l.b16 %v1336
        %v1611 = vunpack.c.h.b16 %v1336
        %v1612 = vunpack.c.l.b16 %v1337
        %v1613 = vunpack.c.h.b16 %v1337
        %v1614 = vunpack.c.l.b16 %v1338
        %v1615 = vunpack.c.h.b16 %v1338
        %v1616 = vunpack.c.l.b16 %v1339
        %v1617 = vunpack.c.h.b16 %v1339
        %v1618 = vunpack.c.l.b16 %v1340
        %v1619 = vunpack.c.h.b16 %v1340
        %v1620 = vunpack.c.l.b16 %v1341
        %v1621 = vunpack.c.h.b16 %v1341
        %v1622 = vunpack.c.l.b16 %v1342
        %v1623 = vunpack.c.h.b16 %v1342
        %v1624 = vunpack.c.l.b16 %v1343
        %v1625 = vunpack.c.h.b16 %v1343
        %v1626 = vunpack.c.l.b16 %v1344
        %v1627 = vunpack.c.h.b16 %v1344
        %v1628 = vunpack.c.l.b16 %v1345
        %v1629 = vunpack.c.h.b16 %v1345
        %v1630 = vunpack.c.l.b16 %v1346
        %v1631 = vunpack.c.h.b16 %v1346
        %v1632 = vunpack.c.l.b16 %v1347
        %v1633 = vunpack.c.h.b16 %v1347
        %v1634 = vunpack.c.l.b16 %v1348
        %v1635 = vunpack.c.h.b16 %v1348
        %v1636 = vunpack.c.l.b16 %v1349
        %v1637 = vunpack.c.h.b16 %v1349
        %v1638 = vunpack.c.l.b16 %v1350
        %v1639 = vunpack.c.h.b16 %v1350
        %v1640 = vunpack.c.l.b16 %v1351
        %v1641 = vunpack.c.h.b16 %v1351
        %v1642 = vunpack.c.l.b16 %v1352
        %v1643 = vunpack.c.h.b16 %v1352
        %v1644 = vunpack.c.l.b16 %v1353
        %v1645 = vunpack.c.h.b16 %v1353
        %v1646 = vunpack.c.l.b16 %v1354
        %v1647 = vunpack.c.h.b16 %v1354
        %v1648 = vunpack.c.l.b16 %v1355
        %v1649 = vunpack.c.h.b16 %v1355
        %v1650 = vpack.c.b16 %v1460, %v1458
        %v1651 = vpack.c.b16 %v1461, %v1459
        %v1652 = vpack.c.b16 %v1464, %v1462
        %v1653 = vpack.c.b16 %v1465, %v1463
        %v1654 = vpack.c.b16 %v1468, %v1466
        %v1655 = vpack.c.b16 %v1469, %v1467
        %v1656 = vpack.c.b16 %v1472, %v1470
        %v1657 = vpack.c.b16 %v1473, %v1471
        %v1658 = vpack.c.b16 %v1476, %v1474
        %v1659 = vpack.c.b16 %v1477, %v1475
        %v1660 = vpack.c.b16 %v1480, %v1478
        %v1661 = vpack.c.b16 %v1481, %v1479
        %v1662 = vpack.c.b16 %v1484, %v1482
        %v1663 = vpack.c.b16 %v1485, %v1483
        %v1664 = vpack.c.b16 %v1488, %v1486
        %v1665 = vpack.c.b16 %v1489, %v1487
        %v1666 = vpack.c.b16 %v1492, %v1490
        %v1667 = vpack.c.b16 %v1493, %v1491
        %v1668 = vpack.c.b16 %v1496, %v1494
        %v1669 = vpack.c.b16 %v1497, %v1495
        %v1670 = vpack.c.b16 %v1500, %v1498
        %v1671 = vpack.c.b16 %v1501, %v1499
        %v1672 = vpack.c.b16 %v1504, %v1502
        %v1673 = vpack.c.b16 %v1505, %v1503
        %v1674 = vpack.c.b16 %v1508, %v1506
        %v1675 = vpack.c.b16 %v1509, %v1507
        %v1676 = vpack.c.b16 %v1512, %v1510
        %v1677 = vpack.c.b16 %v1513, %v1511
        %v1678 = vpack.c.b16 %v1516, %v1514
        %v1679 = vpack.c.b16 %v1517, %v1515
        %v1680 = vpack.c.b16 %v1520, %v1518
        %v1681 = vpack.c.b16 %v1521, %v1519
        %v1682 = vpack.c.b16 %v1524, %v1522
        %v1683 = vpack.c.b16 %v1525, %v1523
        %v1684 = vpack.c.b16 %v1528, %v1526
        %v1685 = vpack.c.b16 %v1529, %v1527
        %v1686 = vpack.c.b16 %v1532, %v1530
        %v1687 = vpack.c.b16 %v1533, %v1531
        %v1688 = vpack.c.b16 %v1536, %v1534
        %v1689 = vpack.c.b16 %v1537, %v1535
        %v1690 = vpack.c.b16 %v1540, %v1538
        %v1691 = vpack.c.b16 %v1541, %v1539
        %v1692 = vpack.c.b16 %v1544, %v1542
        %v1693 = vpack.c.b16 %v1545, %v1543
        %v1694 = vpack.c.b16 %v1548, %v1546
        %v1695 = vpack.c.b16 %v1549, %v1547
        %v1696 = vpack.c.b16 %v1552, %v1550
        %v1697 = vpack.c.b16 %v1553, %v1551
        %v1698 = vpack.c.b16 %v1556, %v1554
        %v1699 = vpack.c.b16 %v1557, %v1555
        %v1700 = vpack.c.b16 %v1560, %v1558
        %v1701 = vpack.c.b16 %v1561, %v1559
        %v1702 = vpack.c.b16 %v1564, %v1562
        %v1703 = vpack.c.b16 %v1565, %v1563
        %v1704 = vpack.c.b16 %v1568, %v1566
        %v1705 = vpack.c.b16 %v1569, %v1567
        %v1706 = vpack.c.b16 %v1572, %v1570
        %v1707 = vpack.c.b16 %v1573, %v1571
        %v1708 = vpack.c.b16 %v1576, %v1574
        %v1709 = vpack.c.b16 %v1577, %v1575
        %v1710 = vpack.c.b16 %v1580, %v1578
        %v1711 = vpack.c.b16 %v1581, %v1579
        %v1712 = vpack.c.b16 %v1584, %v1582
        %v1713 = vpack.c.b16 %v1585, %v1583
        %v1714 = vpack.c.b16 %v1588, %v1586
        %v1715 = vpack.c.b16 %v1589, %v1587
        %v1716 = vpack.c.b16 %v1592, %v1590
        %v1717 = vpack.c.b16 %v1593, %v1591
        %v1718 = vpack.c.b16 %v1596, %v1594
        %v1719 = vpack.c.b16 %v1597, %v1595
        %v1720 = vpack.c.b16 %v1600, %v1598
        %v1721 = vpack.c.b16 %v1601, %v1599
        %v1722 = vpack.c.b16 %v1604, %v1602
        %v1723 = vpack.c.b16 %v1605, %v1603
        %v1724 = vpack.c.b16 %v1608, %v1606
        %v1725 = vpack.c.b16 %v1609, %v1607
        %v1726 = vpack.c.b16 %v1612, %v1610
        %v1727 = vpack.c.b16 %v1613, %v1611
        %v1728 = vpack.c.b16 %v1616, %v1614
        %v1729 = vpack.c.b16 %v1617, %v1615
        %v1730 = vpack.c.b16 %v1620, %v1618
        %v1731 = vpack.c.b16 %v1621, %v1619
        %v1732 = vpack.c.b16 %v1624, %v1622
        %v1733 = vpack.c.b16 %v1625, %v1623
        %v1734 = vpack.c.b16 %v1628, %v1626
        %v1735 = vpack.c.b16 %v1629, %v1627
        %v1736 = vpack.c.b16 %v1632, %v1630
        %v1737 = vpack.c.b16 %v1633, %v1631
        %v1738 = vpack.c.b16 %v1636, %v1634
        %v1739 = vpack.c.b16 %v1637, %v1635
        %v1740 = vpack.c.b16 %v1640, %v1638
        %v1741 = vpack.c.b16 %v1641, %v1639
        %v1742 = vpack.c.b16 %v1644, %v1642
        %v1743 = vpack.c.b16 %v1645, %v1643
        %v1744 = vpack.c.b16 %v1648, %v1646
        %v1745 = vpack.c.b16 %v1649, %v1647
        %1842 = vmatpush.bf16.msra.mxu0 %v1664
        %1843 = vmatpush.bf16.msra.mxu0 %v1662
        %1844 = vmatpush.bf16.msra.mxu0 %v1660
        %1845 = vmatpush.bf16.msra.mxu0 %v1658
        %1846 = vmatpush.bf16.msra.mxu0 %v1656
        %1847 = vmatpush.bf16.msra.mxu0 %v1654
        %1848 = vmatpush.bf16.msra.mxu0 %v1652
        %1849 = vmatpush.bf16.msra.mxu0 %v1650
        %1850 = vmatmul.bf16.gmra.mxu0 %v1160
        %v1851 = vpop.f32.mrf.mxu0
        %v1852 = vadd.f32 %v1358, %v1851
        %v1853 = vpop.f32.mrf.mxu0
        %v1854 = vadd.f32 %v1358, %v1853
        %1855 = vmatmul.bf16.gmra.mxu0 %v1168
        %v1856 = vpop.f32.mrf.mxu0
        %v1857 = vadd.f32 %v1358, %v1856
        %v1858 = vpop.f32.mrf.mxu0
        %v1859 = vadd.f32 %v1358, %v1858
        %1860 = vdwg.mxu0
        %1861 = vmatpush.bf16.msra.mxu0 %v1680
        %1862 = vmatpush.bf16.msra.mxu0 %v1678
        %1863 = vmatpush.bf16.msra.mxu0 %v1676
        %1864 = vmatpush.bf16.msra.mxu0 %v1674
        %1865 = vmatpush.bf16.msra.mxu0 %v1672
        %1866 = vmatpush.bf16.msra.mxu0 %v1670
        %1867 = vmatpush.bf16.msra.mxu0 %v1668
        %1868 = vmatpush.bf16.msra.mxu0 %v1666
        %1869 = vmatmul.bf16.gmra.mxu0 %v1161
        %v1870 = vpop.f32.mrf.mxu0
        %v1871 = vadd.f32 %v1852, %v1870
        %v1872 = vpop.f32.mrf.mxu0
        %v1873 = vadd.f32 %v1854, %v1872
        %1874 = vmatmul.bf16.gmra.mxu0 %v1169
        %v1875 = vpop.f32.mrf.mxu0
        %v1876 = vadd.f32 %v1857, %v1875
        %v1877 = vpop.f32.mrf.mxu0
        %v1878 = vadd.f32 %v1859, %v1877
        %1879 = vdwg.mxu0
        %1880 = vmatpush.bf16.msra.mxu0 %v1696
        %1881 = vmatpush.bf16.msra.mxu0 %v1694
        %1882 = vmatpush.bf16.msra.mxu0 %v1692
        %1883 = vmatpush.bf16.msra.mxu0 %v1690
        %1884 = vmatpush.bf16.msra.mxu0 %v1688
        %1885 = vmatpush.bf16.msra.mxu0 %v1686
        %1886 = vmatpush.bf16.msra.mxu0 %v1684
        %1887 = vmatpush.bf16.msra.mxu0 %v1682
        %1888 = vmatmul.bf16.gmra.mxu0 %v1210
        %v1889 = vpop.f32.mrf.mxu0
        %v1890 = vadd.f32 %v1871, %v1889
        %v1891 = vpop.f32.mrf.mxu0
        %v1892 = vadd.f32 %v1873, %v1891
        %1893 = vmatmul.bf16.gmra.mxu0 %v1223
        %v1894 = vpop.f32.mrf.mxu0
        %v1895 = vadd.f32 %v1876, %v1894
        %v1896 = vpop.f32.mrf.mxu0
        %v1897 = vadd.f32 %v1878, %v1896
        %1898 = vdwg.mxu0
        %1899 = vmatpush.bf16.msra.mxu0 %v1712
        %1900 = vmatpush.bf16.msra.mxu0 %v1710
        %1901 = vmatpush.bf16.msra.mxu0 %v1708
        %1902 = vmatpush.bf16.msra.mxu0 %v1706
        %1903 = vmatpush.bf16.msra.mxu0 %v1704
        %1904 = vmatpush.bf16.msra.mxu0 %v1702
        %1905 = vmatpush.bf16.msra.mxu0 %v1700
        %1906 = vmatpush.bf16.msra.mxu0 %v1698
        %1907 = vmatmul.bf16.gmra.mxu0 %v1220
        %v1908 = vpop.f32.mrf.mxu0
        %v1909 = vadd.f32 %v1890, %v1908
        %v1910 = vpop.f32.mrf.mxu0
        %v1911 = vadd.f32 %v1892, %v1910
        %1912 = vmatmul.bf16.gmra.mxu0 %v1226
        %v1913 = vpop.f32.mrf.mxu0
        %v1914 = vadd.f32 %v1895, %v1913
        %v1915 = vpop.f32.mrf.mxu0
        %v1916 = vadd.f32 %v1897, %v1915
        %1917 = vdwg.mxu0
        %1918 = vmatpush.bf16.msra.mxu0 %v1728
        %1919 = vmatpush.bf16.msra.mxu0 %v1726
        %1920 = vmatpush.bf16.msra.mxu0 %v1724
        %1921 = vmatpush.bf16.msra.mxu0 %v1722
        %1922 = vmatpush.bf16.msra.mxu0 %v1720
        %1923 = vmatpush.bf16.msra.mxu0 %v1718
        %1924 = vmatpush.bf16.msra.mxu0 %v1716
        %1925 = vmatpush.bf16.msra.mxu0 %v1714
        %1926 = vmatmul.bf16.gmra.mxu0 %v1246
        %v1927 = vpop.f32.mrf.mxu0
        %v1928 = vadd.f32 %v1909, %v1927
        %v1929 = vpop.f32.mrf.mxu0
        %v1930 = vadd.f32 %v1911, %v1929
        %1931 = vmatmul.bf16.gmra.mxu0 %v1254
        %v1932 = vpop.f32.mrf.mxu0
        %v1933 = vadd.f32 %v1914, %v1932
        %v1934 = vpop.f32.mrf.mxu0
        %v1935 = vadd.f32 %v1916, %v1934
        %1936 = vdwg.mxu0
        %1937 = vmatpush.bf16.msra.mxu0 %v1744
        %1938 = vmatpush.bf16.msra.mxu0 %v1742
        %1939 = vmatpush.bf16.msra.mxu0 %v1740
        %1940 = vmatpush.bf16.msra.mxu0 %v1738
        %1941 = vmatpush.bf16.msra.mxu0 %v1736
        %1942 = vmatpush.bf16.msra.mxu0 %v1734
        %1943 = vmatpush.bf16.msra.mxu0 %v1732
        %1944 = vmatpush.bf16.msra.mxu0 %v1730
        %1945 = vmatmul.bf16.gmra.mxu0 %v1247
        %v1946 = vpop.f32.mrf.mxu0
        %v1947 = vadd.f32 %v1928, %v1946
        %v1948 = vpop.f32.mrf.mxu0
        %v1949 = vadd.f32 %v1930, %v1948
        %1950 = vmatmul.bf16.gmra.mxu0 %v1255
        %v1951 = vpop.f32.mrf.mxu0
        %v1952 = vadd.f32 %v1933, %v1951
        %v1953 = vpop.f32.mrf.mxu0
        %v1954 = vadd.f32 %v1935, %v1953
        %1955 = vdwg.mxu0
        %1956 = vmatpush.bf16.msra.mxu0 %v1665
        %1957 = vmatpush.bf16.msra.mxu0 %v1663
        %1958 = vmatpush.bf16.msra.mxu0 %v1661
        %1959 = vmatpush.bf16.msra.mxu0 %v1659
        %1960 = vmatpush.bf16.msra.mxu0 %v1657
        %1961 = vmatpush.bf16.msra.mxu0 %v1655
        %1962 = vmatpush.bf16.msra.mxu0 %v1653
        %1963 = vmatpush.bf16.msra.mxu0 %v1651
        %1964 = vmatmul.bf16.gmra.mxu0 %v1160
        %v1965 = vpop.f32.mrf.mxu0
        %v1966 = vadd.f32 %v1359, %v1965
        %v1967 = vpop.f32.mrf.mxu0
        %v1968 = vadd.f32 %v1359, %v1967
        %1969 = vmatmul.bf16.gmra.mxu0 %v1168
        %v1970 = vpop.f32.mrf.mxu0
        %v1971 = vadd.f32 %v1359, %v1970
        %v1972 = vpop.f32.mrf.mxu0
        %v1973 = vadd.f32 %v1359, %v1972
        %1974 = vdwg.mxu0
        %1975 = vmatpush.bf16.msra.mxu0 %v1681
        %1976 = vmatpush.bf16.msra.mxu0 %v1679
        %1977 = vmatpush.bf16.msra.mxu0 %v1677
        %1978 = vmatpush.bf16.msra.mxu0 %v1675
        %1979 = vmatpush.bf16.msra.mxu0 %v1673
        %1980 = vmatpush.bf16.msra.mxu0 %v1671
        %1981 = vmatpush.bf16.msra.mxu0 %v1669
        %1982 = vmatpush.bf16.msra.mxu0 %v1667
        %1983 = vmatmul.bf16.gmra.mxu0 %v1161
        %v1984 = vpop.f32.mrf.mxu0
        %v1985 = vadd.f32 %v1966, %v1984
        %v1986 = vpop.f32.mrf.mxu0
        %v1987 = vadd.f32 %v1968, %v1986
        %1988 = vmatmul.bf16.gmra.mxu0 %v1169
        %v1989 = vpop.f32.mrf.mxu0
        %v1990 = vadd.f32 %v1971, %v1989
        %v1991 = vpop.f32.mrf.mxu0
        %v1992 = vadd.f32 %v1973, %v1991
        %1993 = vdwg.mxu0
        %1994 = vmatpush.bf16.msra.mxu0 %v1697
        %1995 = vmatpush.bf16.msra.mxu0 %v1695
        %1996 = vmatpush.bf16.msra.mxu0 %v1693
        %1997 = vmatpush.bf16.msra.mxu0 %v1691
        %1998 = vmatpush.bf16.msra.mxu0 %v1689
        %1999 = vmatpush.bf16.msra.mxu0 %v1687
        %2000 = vmatpush.bf16.msra.mxu0 %v1685
        %2001 = vmatpush.bf16.msra.mxu0 %v1683
        %2002 = vmatmul.bf16.gmra.mxu0 %v1210
        %v2003 = vpop.f32.mrf.mxu0
        %v2004 = vadd.f32 %v1985, %v2003
        %v2005 = vpop.f32.mrf.mxu0
        %v2006 = vadd.f32 %v1987, %v2005
        %2007 = vmatmul.bf16.gmra.mxu0 %v1223
        %v2008 = vpop.f32.mrf.mxu0
        %v2009 = vadd.f32 %v1990, %v2008
        %v2010 = vpop.f32.mrf.mxu0
        %v2011 = vadd.f32 %v1992, %v2010
        %2012 = vdwg.mxu0
        %2013 = vmatpush.bf16.msra.mxu0 %v1713
        %2014 = vmatpush.bf16.msra.mxu0 %v1711
        %2015 = vmatpush.bf16.msra.mxu0 %v1709
        %2016 = vmatpush.bf16.msra.mxu0 %v1707
        %2017 = vmatpush.bf16.msra.mxu0 %v1705
        %2018 = vmatpush.bf16.msra.mxu0 %v1703
        %2019 = vmatpush.bf16.msra.mxu0 %v1701
        %2020 = vmatpush.bf16.msra.mxu0 %v1699
        %2021 = vmatmul.bf16.gmra.mxu0 %v1220
        %v2022 = vpop.f32.mrf.mxu0
        %v2023 = vadd.f32 %v2004, %v2022
        %v2024 = vpop.f32.mrf.mxu0
        %v2025 = vadd.f32 %v2006, %v2024
        %2026 = vmatmul.bf16.gmra.mxu0 %v1226
        %v2027 = vpop.f32.mrf.mxu0
        %v2028 = vadd.f32 %v2009, %v2027
        %v2029 = vpop.f32.mrf.mxu0
        %v2030 = vadd.f32 %v2011, %v2029
        %2031 = vdwg.mxu0
        %2032 = vmatpush.bf16.msra.mxu0 %v1729
        %2033 = vmatpush.bf16.msra.mxu0 %v1727
        %2034 = vmatpush.bf16.msra.mxu0 %v1725
        %2035 = vmatpush.bf16.msra.mxu0 %v1723
        %2036 = vmatpush.bf16.msra.mxu0 %v1721
        %2037 = vmatpush.bf16.msra.mxu0 %v1719
        %2038 = vmatpush.bf16.msra.mxu0 %v1717
        %2039 = vmatpush.bf16.msra.mxu0 %v1715
        %2040 = vmatmul.bf16.gmra.mxu0 %v1246
        %v2041 = vpop.f32.mrf.mxu0
        %v2042 = vadd.f32 %v2023, %v2041
        %v2043 = vpop.f32.mrf.mxu0
        %v2044 = vadd.f32 %v2025, %v2043
        %2045 = vmatmul.bf16.gmra.mxu0 %v1254
        %v2046 = vpop.f32.mrf.mxu0
        %v2047 = vadd.f32 %v2028, %v2046
        %v2048 = vpop.f32.mrf.mxu0
        %v2049 = vadd.f32 %v2030, %v2048
        %2050 = vdwg.mxu0
        %2051 = vmatpush.bf16.msra.mxu0 %v1745
        %2052 = vmatpush.bf16.msra.mxu0 %v1743
        %2053 = vmatpush.bf16.msra.mxu0 %v1741
        %2054 = vmatpush.bf16.msra.mxu0 %v1739
        %2055 = vmatpush.bf16.msra.mxu0 %v1737
        %2056 = vmatpush.bf16.msra.mxu0 %v1735
        %2057 = vmatpush.bf16.msra.mxu0 %v1733
        %2058 = vmatpush.bf16.msra.mxu0 %v1731
        %2059 = vmatmul.bf16.gmra.mxu0 %v1247
        %v2060 = vpop.f32.mrf.mxu0
        %v2061 = vadd.f32 %v2042, %v2060
        %v2062 = vpop.f32.mrf.mxu0
        %v2063 = vadd.f32 %v2044, %v2062
        %2064 = vmatmul.bf16.gmra.mxu0 %v1255
        %v2065 = vpop.f32.mrf.mxu0
        %v2066 = vadd.f32 %v2047, %v2065
        %v2067 = vpop.f32.mrf.mxu0
        %v2068 = vadd.f32 %v2049, %v2067
        %2069 = vdwg.mxu0
        %v2070 = vmax.f32 %v1947, 0.0
        %v2071 = vmax.f32 %v2061, 0.0
        %v2072 = vmax.f32 %v1949, 0.0
        %v2073 = vmax.f32 %v2063, 0.0
        %v2074 = vmax.f32 %v1952, 0.0
        %v2075 = vmax.f32 %v2066, 0.0
        %v2076 = vmax.f32 %v1954, 0.0
        %v2077 = vmax.f32 %v2068, 0.0
        %2078 = vst [vmem:[%s258] sm:$0xff] %v2070
        %2079 = vst [vmem:[%s258 + $0x8] sm:$0xff] %v2071
        %2080 = vst [vmem:[%s258 + $0x10] sm:$0xff] %v2072
        %2081 = vst [vmem:[%s258 + $0x18] sm:$0xff] %v2073
        %2082 = vst [vmem:[%s258 + $0x20] sm:$0xff] %v2074
        %2083 = vst [vmem:[%s258 + $0x28] sm:$0xff] %v2075
        %2084 = vst [vmem:[%s258 + $0x30] sm:$0xf] %v2076
        %2085 = vst [vmem:[%s258 + $0x38] sm:$0xf] %v2077
        %p2086 = scmp.lt.s32.totalorder %s18, 1
        %s2087 = scalar_select %p2086, %s18, 1
        %s2088 = smul.addr %s2087, 8
        %s2089 = smul.addr %s2088, 8
        %s2090 = scalar_lea.vmem %s5, %s2089
        // Predicated region
        $region49: #{forward.1} parent=39 // pred_check
          %p2091 = pneg %p146
        $region50: #{forward.1} parent=39 // pred_check_branch
          %2093 = sbr.rel (%p2091) target = $region52
        $region51: #{forward.1} parent=39 // pred_region
          _
        $region52: #{forward.1} parent=39 // pred_fallthru
          _
      $region40: #{forward.1} parent=5 // pred_fallthru
        _
      %p2094 = scmp.le.s32.totalorder 2, %s13
      // Predicated region
      $region53: #{forward.1} parent=5 // pred_check
        %p2095 = pneg %p2094
      $region54: #{forward.1} parent=5 // pred_check_branch
        %2097 = sbr.rel (%p2095) target = $region56
      $region55: #{forward.1} parent=5 // pred_region
        %s2098 = ssub.s32 %s13, 2
        // Predicated region
        $region57: #{forward.1} parent=55 // pred_check
          %p2099 = pneg %p152
        $region58: #{forward.1} parent=55 // pred_check_branch
          %2101 = sbr.rel (%p2099) target = $region60
        $region59: #{forward.1} parent=55 // pred_region
          %p2102 = scmp.lt.s32.totalorder %s19, 1
          %s2103 = scalar_select %p2102, %s19, 1
          %s2104 = smul.addr %s2103, 8
          %s2105 = smul.addr %s2104, 8
          %s2106 = scalar_lea.vmem %s5, %s2105
        $region60: #{forward.1} parent=55 // pred_fallthru
          _
      $region56: #{forward.1} parent=5 // pred_fallthru
        _
    $region6: #{forward.1} parent=1 // loop_footer
      %s17 = sadd.s32 1, %s13
    $region7: #{forward.1} parent=1 // loop_footer_branch
      %12 = sbr.rel target = $region3
    $region8: #{forward.1} parent=1 // loop_exit
      _
    %2107 = vsyncpa [#allocation3], 1
    %s2108 = scalar_lea.sflag [#allocation3], 1
    %2109 = vsyncpa %s2108, 1
    %2110 = vsyncpa [#allocation5], 1

</llo_original>
